<compile_context>
chip_gen: v7x
topology: tpu7x:2x2x1
jax: 0.10.0
libtpu: 0.0.40
codegen_flags: <defaults>
</compile_context>

<pallas_src>
import numpy as np
import jax
import jax.numpy as jnp
from jax.experimental import pallas as pl
from jax.experimental.pallas import tpu as pltpu


# ----------------------------- configuration (small, consistent with module) --
B = 2          # batch size
T = 4          # num_terms
P = 3          # num predict_terms
L = 32         # raw signal length per term
C_OUT, K = 2, 8            # encoderparameters = (out_channels, kernel=stride)
S = L // K                 # conv output length per channel
FEAT = C_OUT * S           # ARparameters[0] * encoderparameters[0] (GRU input)
H = 16                     # ARparameters[1] (GRU hidden / context size)
TB = T * B                 # total GRU steps (torch GRU "batch" dim is 1)
BP = B * P

# --- weight-slab layout (rows; all offsets are multiples of 8 -> aligned loads)
ROW_WBIG = 0                 # (L,    FEAT)   encoder conv as dense matmul
ROW_WIH = ROW_WBIG + L       # (FEAT, 3H)     GRU input-side weights [r|z|n]
ROW_WHH = ROW_WIH + FEAT     # (H,    3H)     GRU hidden-side weights [r|z|n]
ROW_WPRED = ROW_WHH + H      # (FEAT, H)      prediction head (un-transposed)
ROW_PREDR = ROW_WPRED + FEAT  # (B,   BP)     per-batch predict-term reducer * 1/(P*FEAT)
ROW_BIAS = 72                # (1, FEAT+4H)   [bbig | b_r | b_z | b_in | b_hn]
SLAB_ROWS = 80
SLAB_COLS = 128


def _sigmoid_fast(v):
    # sigmoid(v) == 0.5 * (tanh(v/2) + 1): exact, single EUP transcendental.
    return 0.5 * jnp.tanh(0.5 * v) + 0.5


# ------------------------------------------------------------------ the kernel
def _cpc_kernel(x_ref, w_ref, out_ref, gi_ref):
    # Static, sublane-aligned slices of the packed weight slab.
    wbig = w_ref[ROW_WBIG:ROW_WBIG + L, 0:FEAT]              # (L, FEAT)
    wih = w_ref[ROW_WIH:ROW_WIH + FEAT, 0:3 * H]             # (FEAT, 3H)
    whh = w_ref[ROW_WHH:ROW_WHH + H, 0:3 * H]                # (H, 3H)
    wpred = w_ref[ROW_WPRED:ROW_WPRED + FEAT, 0:H]           # (FEAT, H)
    predr = w_ref[ROW_PREDR:ROW_PREDR + B, 0:BP]             # (B, BP), pre-scaled
    bias = w_ref[ROW_BIAS:ROW_BIAS + 1, 0:FEAT + 4 * H]      # (1, FEAT + 4H)
    bbig = bias[:, 0:FEAT]
    b_i = bias[:, FEAT:FEAT + 3 * H]                         # [b_r | b_z | b_in]
    b_hn = bias[:, FEAT + 3 * H:FEAT + 4 * H]

    # --- encoder (Conv1d stride==kernel as one dense matmul) + ReLU ----------
    # rows 0..TB-1 = GRU sequence (term-major, batch-minor); rows TB.. = preds
    enc_all = jnp.maximum(
        jnp.dot(x_ref[...], wbig, preferred_element_type=jnp.float32) + bbig,
        0.0)                                                 # (TB + B*P, FEAT)
    enc_terms = enc_all[:TB, :]                              # (TB, FEAT)
    enc_preds = enc_all[TB:, :]                              # (B*P, FEAT)

    # --- prediction-side math hoisted OFF the post-GRU tail ------------------
    # m[b] = (1/(P*FEAT)) * (sum_p enc_pred[b,p,:]) @ w_pred   (B, H)
    m = jnp.dot(jnp.dot(predr, enc_preds, preferred_element_type=jnp.float32),
                wpred, preferred_element_type=jnp.float32)

    # --- hoisted input-side GRU matmul: once, off the serial h-carry chain ---
    gi_ref[...] = (jnp.dot(enc_terms, wih,
                           preferred_element_type=jnp.float32) + b_i)  # (TB, 3H)

    # --- GRU over the TB-long sequence, fully unrolled (TB is static) --------
    h = jnp.zeros((1, H), jnp.float32)
    ctx_rows = []
    for step in range(TB):
        gi = gi_ref[pl.ds(step, 1), :]                       # (1, 3H), static slice
        gh = jnp.dot(h, whh, preferred_element_type=jnp.float32)       # (1, 3H)
        r = _sigmoid_fast(gi[:, 0:H] + gh[:, 0:H])
        z = _sigmoid_fast(gi[:, H:2 * H] + gh[:, H:2 * H])
        n = jnp.tanh(gi[:, 2 * H:3 * H] + r * (gh[:, 2 * H:3 * H] + b_hn))
        h = (1.0 - z) * n + z * h
        if step >= TB - B:                                   # only last term's hiddens
            ctx_rows.append(h)
    context = jnp.concatenate(ctx_rows, axis=0)              # (B, H)

    # --- cheap post-GRU tail: per-row dot with precomputed m, then sigmoid ---
    score = jnp.sum(context * m, axis=1, keepdims=True)      # (B, 1)
    out_ref[...] = _sigmoid_fast(score)


# ----------------------------------------------- one-time host weight packing
def pack_weights(params):
    """Packs all model weights into a single (SLAB_ROWS, 128) f32 slab. Done once."""
    conv_w, conv_b, w_ih, w_hh, b_ih, b_hh, w_pred = (np.asarray(p, np.float32)
                                                      for p in params)
    slab = np.zeros((SLAB_ROWS, SLAB_COLS), np.float32)

    # Encoder-as-matmul weight: Wbig[s*K + k, c*S + s] = conv_w[c, 0, k]
    for c in range(C_OUT):
        for s in range(S):
            slab[ROW_WBIG + s * K:ROW_WBIG + (s + 1) * K, c * S + s] = conv_w[c, 0, :]

    # GRU weights fused per side (PyTorch gate row order r, z, n), transposed.
    slab[ROW_WIH:ROW_WIH + FEAT, 0:3 * H] = w_ih.T           # (FEAT, 3H)
    slab[ROW_WHH:ROW_WHH + H, 0:3 * H] = w_hh.T              # (H, 3H)

    # Prediction head, un-transposed: m = s @ w_pred  (w_pred is (FEAT, H)).
    slab[ROW_WPRED:ROW_WPRED + FEAT, 0:H] = w_pred

    # Per-batch predict-term reducer, with the 1/(P*FEAT) mean folded in.
    predr = np.zeros((B, BP), np.float32)
    for b in range(B):
        predr[b, b * P:(b + 1) * P] = 1.0 / float(P * FEAT)
    slab[ROW_PREDR:ROW_PREDR + B, 0:BP] = predr

    # Biases: [bbig | b_r | b_z | b_in | b_hn]
    bbig = np.repeat(conv_b, S)                              # (FEAT,), layout c*S+s
    b_r = b_ih[0:H] + b_hh[0:H]
    b_z = b_ih[H:2 * H] + b_hh[H:2 * H]
    b_in = b_ih[2 * H:3 * H]
    b_hn = b_hh[2 * H:3 * H]
    slab[ROW_BIAS, 0:FEAT + 4 * H] = np.concatenate([bbig, b_r, b_z, b_in, b_hn])

    return jnp.asarray(slab)


# --------------------------------------------------------------- host wrapper
@jax.jit
def cpc_net_forward(terms, predict_terms, weight_slab):
    # Sequence order the torch GRU actually sees: term-index major, batch minor;
    # predict-term rows appended so the encoder runs as a single matmul.
    terms_seq = jnp.transpose(terms, (1, 0, 2)).reshape(TB, L)
    preds_flat = predict_terms.reshape(BP, L)
    x_all = jnp.concatenate([terms_seq, preds_flat], axis=0).astype(jnp.float32)

    out = pl.pallas_call(
        _cpc_kernel,
        out_shape=jax.ShapeDtypeStruct((B, 1), jnp.float32),
        in_specs=[pl.BlockSpec(memory_space=pltpu.MemorySpace.VMEM),
                  pl.BlockSpec(memory_space=pltpu.MemorySpace.VMEM)],
        out_specs=pl.BlockSpec(memory_space=pltpu.MemorySpace.VMEM),
        scratch_shapes=[pltpu.VMEM((TB, 3 * H), jnp.float32)],   # hoisted gi
    )(x_all, weight_slab)
    return out[:, 0]   # (B,) probabilities, matching torch's output shape


# ------------------------------------------------------- pure-JAX reference
def reference_forward(terms, predict_terms, params):
    conv_w, conv_b, w_ih, w_hh, b_ih, b_hh, w_pred = params

    def encoder(x):                                   # x: (B, L)
        xw = x.reshape(B, S, K)
        out = jnp.einsum('bsk,ck->bcs', xw, conv_w[:, 0, :]) + conv_b[None, :, None]
        return jnp.maximum(out, 0.0)                  # (B, C_OUT, S)

    def gru_cell(x, h):                               # 1-D vectors
        gi = w_ih @ x + b_ih
        gh = w_hh @ h + b_hh
        r = jax.nn.sigmoid(gi[:H] + gh[:H])
        z = jax.nn.sigmoid(gi[H:2 * H] + gh[H:2 * H])
        n = jnp.tanh(gi[2 * H:] + r * gh[2 * H:])
        return (1 - z) * n + z * h

    h = jnp.zeros((H,), jnp.float32)
    context = jnp.zeros((B, H), jnp.float32)
    for j in range(T):
        enc = encoder(terms[:, j, :]).reshape(B, FEAT)
        for b in range(B):
            h = gru_cell(enc[b], h)
            if j == T - 1:
                context = context.at[b].set(h)
    preds = context @ w_pred.T                         # (B, FEAT)
    enc_p = jnp.stack([encoder(predict_terms[:, p, :]).reshape(B, FEAT)
                       for p in range(P)], axis=1)     # (B, P, FEAT)
    dot = (enc_p * preds[:, None, :]).mean(-1).mean(-1)
    return jax.nn.sigmoid(dot)


# ---------------------------------------------------------------------- main
if __name__ == "__main__":
    key = jax.random.PRNGKey(0)
    ks = jax.random.split(key, 9)

    # Deterministic synthetic parameters (shapes from the module __init__).
    conv_w = 0.2 * jax.random.normal(ks[0], (C_OUT, 1, K), jnp.float32)
    conv_b = 0.1 * jax.random.normal(ks[1], (C_OUT,), jnp.float32)
    w_ih = 0.2 * jax.random.normal(ks[2], (3 * H, FEAT), jnp.float32)
    w_hh = 0.2 * jax.random.normal(ks[3], (3 * H, H), jnp.float32)
    b_ih = 0.1 * jax.random.normal(ks[4], (3 * H,), jnp.float32)
    b_hh = 0.1 * jax.random.normal(ks[5], (3 * H,), jnp.float32)
    w_pred = 0.2 * jax.random.normal(ks[6], (FEAT, H), jnp.float32)
    params = (conv_w, conv_b, w_ih, w_hh, b_ih, b_hh, w_pred)

    # Inputs: x = ((terms, ...), (predict_terms, ...)) in the torch module;
    # here we pass terms / predict_terms directly.
    terms = jax.random.normal(ks[7], (B, T, L), jnp.float32)
    predict_terms = jax.random.normal(ks[8], (B, P, L), jnp.float32)

    # One-time weight packing (hoisted off the per-call path).
    weight_slab = jax.block_until_ready(pack_weights(params))

    probs = jax.block_until_ready(cpc_net_forward(terms, predict_terms, weight_slab))
    ref = jax.block_until_ready(reference_forward(terms, predict_terms, params))

    assert probs.shape == (B,), probs.shape
    assert bool(jnp.all(jnp.isfinite(probs)))
    assert bool(jnp.allclose(probs, ref, atol=2e-2, rtol=2e-2)), (probs, ref)
    print("KERNEL_OK")
</pallas_src>

<mosaic_0001>
module attributes {stable_mosaic.version = 11 : i64} {
  func.func @_cpc_kernel(%arg0: memref<14x32xf32, #tpu.memory_space<vmem>>, %arg1: memref<80x128xf32, #tpu.memory_space<vmem>>, %arg2: memref<2x1xf32, #tpu.memory_space<vmem>>, %arg3: memref<8x48xf32, #tpu.memory_space<vmem>>) attributes {dimension_semantics = [], scalar_prefetch = 0 : i64, scratch_operands = 1 : i64, tpu.core_type = #tpu.core_type<tc>} {
    %c0 = arith.constant 0 : index
    %c0_0 = arith.constant 0 : index
    %0 = vector.load %arg1[%c0, %c0_0] : memref<80x128xf32, #tpu.memory_space<vmem>>, vector<32x8xf32>
    %c32 = arith.constant 32 : index
    %c0_1 = arith.constant 0 : index
    %1 = vector.load %arg1[%c32, %c0_1] : memref<80x128xf32, #tpu.memory_space<vmem>>, vector<8x48xf32>
    %c40 = arith.constant 40 : index
    %c0_2 = arith.constant 0 : index
    %2 = vector.load %arg1[%c40, %c0_2] : memref<80x128xf32, #tpu.memory_space<vmem>>, vector<16x48xf32>
    %c56 = arith.constant 56 : index
    %c0_3 = arith.constant 0 : index
    %3 = vector.load %arg1[%c56, %c0_3] : memref<80x128xf32, #tpu.memory_space<vmem>>, vector<8x16xf32>
    %c64 = arith.constant 64 : index
    %c0_4 = arith.constant 0 : index
    %4 = vector.load %arg1[%c64, %c0_4] : memref<80x128xf32, #tpu.memory_space<vmem>>, vector<2x6xf32>
    %c72 = arith.constant 72 : index
    %c0_5 = arith.constant 0 : index
    %5 = vector.load %arg1[%c72, %c0_5] : memref<80x128xf32, #tpu.memory_space<vmem>>, vector<1x72xf32>
    %6 = vector.extract_strided_slice %5 {offsets = [0, 0], sizes = [1, 8], strides = [1, 1]} : vector<1x72xf32> to vector<1x8xf32>
    %7 = vector.extract_strided_slice %5 {offsets = [0, 8], sizes = [1, 48], strides = [1, 1]} : vector<1x72xf32> to vector<1x48xf32>
    %8 = vector.extract_strided_slice %5 {offsets = [0, 56], sizes = [1, 16], strides = [1, 1]} : vector<1x72xf32> to vector<1x16xf32>
    %c0_6 = arith.constant 0 : index
    %c0_7 = arith.constant 0 : index
    %9 = vector.load %arg0[%c0_6, %c0_7] : memref<14x32xf32, #tpu.memory_space<vmem>>, vector<14x32xf32>
    %cst = arith.constant dense<0.000000e+00> : vector<14x8xf32>
    %10 = tpu.matmul %9, %0, %cst {dimension_numbers = #tpu.dot_dimension_numbers<[1], [0], [0], [1], [0, 0, 1, 1], [], []>} : vector<14x32xf32>, vector<32x8xf32>, vector<14x8xf32> -> vector<14x8xf32>
    %11 = vector.broadcast %6 : vector<1x8xf32> to vector<14x8xf32>
    %12 = arith.addf %10, %11 : vector<14x8xf32>
    %cst_8 = arith.constant 0.000000e+00 : f32
    %13 = vector.broadcast %cst_8 : f32 to vector<14x8xf32>
    %14 = arith.maximumf %12, %13 : vector<14x8xf32>
    %15 = vector.extract_strided_slice %14 {offsets = [0, 0], sizes = [8, 8], strides = [1, 1]} : vector<14x8xf32> to vector<8x8xf32>
    %16 = vector.extract_strided_slice %14 {offsets = [8, 0], sizes = [6, 8], strides = [1, 1]} : vector<14x8xf32> to vector<6x8xf32>
    %cst_9 = arith.constant dense<0.000000e+00> : vector<2x8xf32>
    %17 = tpu.matmul %4, %16, %cst_9 {dimension_numbers = #tpu.dot_dimension_numbers<[1], [0], [0], [1], [0, 0, 1, 1], [], []>} : vector<2x6xf32>, vector<6x8xf32>, vector<2x8xf32> -> vector<2x8xf32>
    %cst_10 = arith.constant dense<0.000000e+00> : vector<2x16xf32>
    %18 = tpu.matmul %17, %3, %cst_10 {dimension_numbers = #tpu.dot_dimension_numbers<[1], [0], [0], [1], [0, 0, 1, 1], [], []>} : vector<2x8xf32>, vector<8x16xf32>, vector<2x16xf32> -> vector<2x16xf32>
    %cst_11 = arith.constant dense<0.000000e+00> : vector<8x48xf32>
    %19 = tpu.matmul %15, %1, %cst_11 {dimension_numbers = #tpu.dot_dimension_numbers<[1], [0], [0], [1], [0, 0, 1, 1], [], []>} : vector<8x8xf32>, vector<8x48xf32>, vector<8x48xf32> -> vector<8x48xf32>
    %20 = vector.broadcast %7 : vector<1x48xf32> to vector<8x48xf32>
    %21 = arith.addf %19, %20 : vector<8x48xf32>
    %c0_12 = arith.constant 0 : index
    %c0_13 = arith.constant 0 : index
    %22 = vector.load %arg3[%c0_12, %c0_13] : memref<8x48xf32, #tpu.memory_space<vmem>>, vector<8x48xf32>
    tpu.vector_store %arg3[%c0_12, %c0_13], %21 {strides = array<i32>} : memref<8x48xf32, #tpu.memory_space<vmem>>, vector<8x48xf32>,
    %cst_14 = arith.constant 0.000000e+00 : f32
    %23 = vector.broadcast %cst_14 : f32 to vector<1x16xf32>
    %c0_15 = arith.constant 0 : index
    %c0_16 = arith.constant 0 : index
    %24 = vector.load %arg3[%c0_15, %c0_16] : memref<8x48xf32, #tpu.memory_space<vmem>>, vector<1x48xf32>
    %cst_17 = arith.constant dense<0.000000e+00> : vector<1x48xf32>
    %25 = tpu.matmul %23, %2, %cst_17 {dimension_numbers = #tpu.dot_dimension_numbers<[1], [0], [0], [1], [0, 0, 1, 1], [], []>} : vector<1x16xf32>, vector<16x48xf32>, vector<1x48xf32> -> vector<1x48xf32>
    %26 = vector.extract_strided_slice %24 {offsets = [0, 0], sizes = [1, 16], strides = [1, 1]} : vector<1x48xf32> to vector<1x16xf32>
    %27 = vector.extract_strided_slice %25 {offsets = [0, 0], sizes = [1, 16], strides = [1, 1]} : vector<1x48xf32> to vector<1x16xf32>
    %28 = arith.addf %26, %27 : vector<1x16xf32>
    %cst_18 = arith.constant 5.000000e-01 : f32
    %29 = vector.broadcast %cst_18 : f32 to vector<1x16xf32>
    %30 = arith.mulf %29, %28 : vector<1x16xf32>
    %31 = math.tanh %30 : vector<1x16xf32>
    %cst_19 = arith.constant 5.000000e-01 : f32
    %32 = vector.broadcast %cst_19 : f32 to vector<1x16xf32>
    %33 = arith.mulf %32, %31 : vector<1x16xf32>
    %cst_20 = arith.constant 5.000000e-01 : f32
    %34 = vector.broadcast %cst_20 : f32 to vector<1x16xf32>
    %35 = arith.addf %33, %34 : vector<1x16xf32>
    %36 = vector.extract_strided_slice %24 {offsets = [0, 16], sizes = [1, 16], strides = [1, 1]} : vector<1x48xf32> to vector<1x16xf32>
    %37 = vector.extract_strided_slice %25 {offsets = [0, 16], sizes = [1, 16], strides = [1, 1]} : vector<1x48xf32> to vector<1x16xf32>
    %38 = arith.addf %36, %37 : vector<1x16xf32>
    %cst_21 = arith.constant 5.000000e-01 : f32
    %39 = vector.broadcast %cst_21 : f32 to vector<1x16xf32>
    %40 = arith.mulf %39, %38 : vector<1x16xf32>
    %41 = math.tanh %40 : vector<1x16xf32>
    %cst_22 = arith.constant 5.000000e-01 : f32
    %42 = vector.broadcast %cst_22 : f32 to vector<1x16xf32>
    %43 = arith.mulf %42, %41 : vector<1x16xf32>
    %cst_23 = arith.constant 5.000000e-01 : f32
    %44 = vector.broadcast %cst_23 : f32 to vector<1x16xf32>
    %45 = arith.addf %43, %44 : vector<1x16xf32>
    %46 = vector.extract_strided_slice %24 {offsets = [0, 32], sizes = [1, 16], strides = [1, 1]} : vector<1x48xf32> to vector<1x16xf32>
    %47 = vector.extract_strided_slice %25 {offsets = [0, 32], sizes = [1, 16], strides = [1, 1]} : vector<1x48xf32> to vector<1x16xf32>
    %48 = arith.addf %47, %8 : vector<1x16xf32>
    %49 = arith.mulf %35, %48 : vector<1x16xf32>
    %50 = arith.addf %46, %49 : vector<1x16xf32>
    %51 = math.tanh %50 : vector<1x16xf32>
    %cst_24 = arith.constant 1.000000e+00 : f32
    %52 = vector.broadcast %cst_24 : f32 to vector<1x16xf32>
    %53 = arith.subf %52, %45 : vector<1x16xf32>
    %54 = arith.mulf %53, %51 : vector<1x16xf32>
    %55 = arith.mulf %45, %23 : vector<1x16xf32>
    %56 = arith.addf %54, %55 : vector<1x16xf32>
    %c1 = arith.constant 1 : index
    %c0_25 = arith.constant 0 : index
    %57 = vector.load %arg3[%c1, %c0_25] : memref<8x48xf32, #tpu.memory_space<vmem>>, vector<1x48xf32>
    %cst_26 = arith.constant dense<0.000000e+00> : vector<1x48xf32>
    %58 = tpu.matmul %56, %2, %cst_26 {dimension_numbers = #tpu.dot_dimension_numbers<[1], [0], [0], [1], [0, 0, 1, 1], [], []>} : vector<1x16xf32>, vector<16x48xf32>, vector<1x48xf32> -> vector<1x48xf32>
    %59 = vector.extract_strided_slice %57 {offsets = [0, 0], sizes = [1, 16], strides = [1, 1]} : vector<1x48xf32> to vector<1x16xf32>
    %60 = vector.extract_strided_slice %58 {offsets = [0, 0], sizes = [1, 16], strides = [1, 1]} : vector<1x48xf32> to vector<1x16xf32>
    %61 = arith.addf %59, %60 : vector<1x16xf32>
    %cst_27 = arith.constant 5.000000e-01 : f32
    %62 = vector.broadcast %cst_27 : f32 to vector<1x16xf32>
    %63 = arith.mulf %62, %61 : vector<1x16xf32>
    %64 = math.tanh %63 : vector<1x16xf32>
    %cst_28 = arith.constant 5.000000e-01 : f32
    %65 = vector.broadcast %cst_28 : f32 to vector<1x16xf32>
    %66 = arith.mulf %65, %64 : vector<1x16xf32>
    %cst_29 = arith.constant 5.000000e-01 : f32
    %67 = vector.broadcast %cst_29 : f32 to vector<1x16xf32>
    %68 = arith.addf %66, %67 : vector<1x16xf32>
    %69 = vector.extract_strided_slice %57 {offsets = [0, 16], sizes = [1, 16], strides = [1, 1]} : vector<1x48xf32> to vector<1x16xf32>
    %70 = vector.extract_strided_slice %58 {offsets = [0, 16], sizes = [1, 16], strides = [1, 1]} : vector<1x48xf32> to vector<1x16xf32>
    %71 = arith.addf %69, %70 : vector<1x16xf32>
    %cst_30 = arith.constant 5.000000e-01 : f32
    %72 = vector.broadcast %cst_30 : f32 to vector<1x16xf32>
    %73 = arith.mulf %72, %71 : vector<1x16xf32>
    %74 = math.tanh %73 : vector<1x16xf32>
    %cst_31 = arith.constant 5.000000e-01 : f32
    %75 = vector.broadcast %cst_31 : f32 to vector<1x16xf32>
    %76 = arith.mulf %75, %74 : vector<1x16xf32>
    %cst_32 = arith.constant 5.000000e-01 : f32
    %77 = vector.broadcast %cst_32 : f32 to vector<1x16xf32>
    %78 = arith.addf %76, %77 : vector<1x16xf32>
    %79 = vector.extract_strided_slice %57 {offsets = [0, 32], sizes = [1, 16], strides = [1, 1]} : vector<1x48xf32> to vector<1x16xf32>
    %80 = vector.extract_strided_slice %58 {offsets = [0, 32], sizes = [1, 16], strides = [1, 1]} : vector<1x48xf32> to vector<1x16xf32>
    %81 = arith.addf %80, %8 : vector<1x16xf32>
    %82 = arith.mulf %68, %81 : vector<1x16xf32>
    %83 = arith.addf %79, %82 : vector<1x16xf32>
    %84 = math.tanh %83 : vector<1x16xf32>
    %cst_33 = arith.constant 1.000000e+00 : f32
    %85 = vector.broadcast %cst_33 : f32 to vector<1x16xf32>
    %86 = arith.subf %85, %78 : vector<1x16xf32>
    %87 = arith.mulf %86, %84 : vector<1x16xf32>
    %88 = arith.mulf %78, %56 : vector<1x16xf32>
    %89 = arith.addf %87, %88 : vector<1x16xf32>
    %c2 = arith.constant 2 : index
    %c0_34 = arith.constant 0 : index
    %90 = vector.load %arg3[%c2, %c0_34] : memref<8x48xf32, #tpu.memory_space<vmem>>, vector<1x48xf32>
    %cst_35 = arith.constant dense<0.000000e+00> : vector<1x48xf32>
    %91 = tpu.matmul %89, %2, %cst_35 {dimension_numbers = #tpu.dot_dimension_numbers<[1], [0], [0], [1], [0, 0, 1, 1], [], []>} : vector<1x16xf32>, vector<16x48xf32>, vector<1x48xf32> -> vector<1x48xf32>
    %92 = vector.extract_strided_slice %90 {offsets = [0, 0], sizes = [1, 16], strides = [1, 1]} : vector<1x48xf32> to vector<1x16xf32>
    %93 = vector.extract_strided_slice %91 {offsets = [0, 0], sizes = [1, 16], strides = [1, 1]} : vector<1x48xf32> to vector<1x16xf32>
    %94 = arith.addf %92, %93 : vector<1x16xf32>
    %cst_36 = arith.constant 5.000000e-01 : f32
    %95 = vector.broadcast %cst_36 : f32 to vector<1x16xf32>
    %96 = arith.mulf %95, %94 : vector<1x16xf32>
    %97 = math.tanh %96 : vector<1x16xf32>
    %cst_37 = arith.constant 5.000000e-01 : f32
    %98 = vector.broadcast %cst_37 : f32 to vector<1x16xf32>
    %99 = arith.mulf %98, %97 : vector<1x16xf32>
    %cst_38 = arith.constant 5.000000e-01 : f32
    %100 = vector.broadcast %cst_38 : f32 to vector<1x16xf32>
    %101 = arith.addf %99, %100 : vector<1x16xf32>
    %102 = vector.extract_strided_slice %90 {offsets = [0, 16], sizes = [1, 16], strides = [1, 1]} : vector<1x48xf32> to vector<1x16xf32>
    %103 = vector.extract_strided_slice %91 {offsets = [0, 16], sizes = [1, 16], strides = [1, 1]} : vector<1x48xf32> to vector<1x16xf32>
    %104 = arith.addf %102, %103 : vector<1x16xf32>
    %cst_39 = arith.constant 5.000000e-01 : f32
    %105 = vector.broadcast %cst_39 : f32 to vector<1x16xf32>
    %106 = arith.mulf %105, %104 : vector<1x16xf32>
    %107 = math.tanh %106 : vector<1x16xf32>
    %cst_40 = arith.constant 5.000000e-01 : f32
    %108 = vector.broadcast %cst_40 : f32 to vector<1x16xf32>
    %109 = arith.mulf %108, %107 : vector<1x16xf32>
    %cst_41 = arith.constant 5.000000e-01 : f32
    %110 = vector.broadcast %cst_41 : f32 to vector<1x16xf32>
    %111 = arith.addf %109, %110 : vector<1x16xf32>
    %112 = vector.extract_strided_slice %90 {offsets = [0, 32], sizes = [1, 16], strides = [1, 1]} : vector<1x48xf32> to vector<1x16xf32>
    %113 = vector.extract_strided_slice %91 {offsets = [0, 32], sizes = [1, 16], strides = [1, 1]} : vector<1x48xf32> to vector<1x16xf32>
    %114 = arith.addf %113, %8 : vector<1x16xf32>
    %115 = arith.mulf %101, %114 : vector<1x16xf32>
    %116 = arith.addf %112, %115 : vector<1x16xf32>
    %117 = math.tanh %116 : vector<1x16xf32>
    %cst_42 = arith.constant 1.000000e+00 : f32
    %118 = vector.broadcast %cst_42 : f32 to vector<1x16xf32>
    %119 = arith.subf %118, %111 : vector<1x16xf32>
    %120 = arith.mulf %119, %117 : vector<1x16xf32>
    %121 = arith.mulf %111, %89 : vector<1x16xf32>
    %122 = arith.addf %120, %121 : vector<1x16xf32>
    %c3 = arith.constant 3 : index
    %c0_43 = arith.constant 0 : index
    %123 = vector.load %arg3[%c3, %c0_43] : memref<8x48xf32, #tpu.memory_space<vmem>>, vector<1x48xf32>
    %cst_44 = arith.constant dense<0.000000e+00> : vector<1x48xf32>
    %124 = tpu.matmul %122, %2, %cst_44 {dimension_numbers = #tpu.dot_dimension_numbers<[1], [0], [0], [1], [0, 0, 1, 1], [], []>} : vector<1x16xf32>, vector<16x48xf32>, vector<1x48xf32> -> vector<1x48xf32>
    %125 = vector.extract_strided_slice %123 {offsets = [0, 0], sizes = [1, 16], strides = [1, 1]} : vector<1x48xf32> to vector<1x16xf32>
    %126 = vector.extract_strided_slice %124 {offsets = [0, 0], sizes = [1, 16], strides = [1, 1]} : vector<1x48xf32> to vector<1x16xf32>
    %127 = arith.addf %125, %126 : vector<1x16xf32>
    %cst_45 = arith.constant 5.000000e-01 : f32
    %128 = vector.broadcast %cst_45 : f32 to vector<1x16xf32>
    %129 = arith.mulf %128, %127 : vector<1x16xf32>
    %130 = math.tanh %129 : vector<1x16xf32>
    %cst_46 = arith.constant 5.000000e-01 : f32
    %131 = vector.broadcast %cst_46 : f32 to vector<1x16xf32>
    %132 = arith.mulf %131, %130 : vector<1x16xf32>
    %cst_47 = arith.constant 5.000000e-01 : f32
    %133 = vector.broadcast %cst_47 : f32 to vector<1x16xf32>
    %134 = arith.addf %132, %133 : vector<1x16xf32>
    %135 = vector.extract_strided_slice %123 {offsets = [0, 16], sizes = [1, 16], strides = [1, 1]} : vector<1x48xf32> to vector<1x16xf32>
    %136 = vector.extract_strided_slice %124 {offsets = [0, 16], sizes = [1, 16], strides = [1, 1]} : vector<1x48xf32> to vector<1x16xf32>
    %137 = arith.addf %135, %136 : vector<1x16xf32>
    %cst_48 = arith.constant 5.000000e-01 : f32
    %138 = vector.broadcast %cst_48 : f32 to vector<1x16xf32>
    %139 = arith.mulf %138, %137 : vector<1x16xf32>
    %140 = math.tanh %139 : vector<1x16xf32>
    %cst_49 = arith.constant 5.000000e-01 : f32
    %141 = vector.broadcast %cst_49 : f32 to vector<1x16xf32>
    %142 = arith.mulf %141, %140 : vector<1x16xf32>
    %cst_50 = arith.constant 5.000000e-01 : f32
    %143 = vector.broadcast %cst_50 : f32 to vector<1x16xf32>
    %144 = arith.addf %142, %143 : vector<1x16xf32>
    %145 = vector.extract_strided_slice %123 {offsets = [0, 32], sizes = [1, 16], strides = [1, 1]} : vector<1x48xf32> to vector<1x16xf32>
    %146 = vector.extract_strided_slice %124 {offsets = [0, 32], sizes = [1, 16], strides = [1, 1]} : vector<1x48xf32> to vector<1x16xf32>
    %147 = arith.addf %146, %8 : vector<1x16xf32>
    %148 = arith.mulf %134, %147 : vector<1x16xf32>
    %149 = arith.addf %145, %148 : vector<1x16xf32>
    %150 = math.tanh %149 : vector<1x16xf32>
    %cst_51 = arith.constant 1.000000e+00 : f32
    %151 = vector.broadcast %cst_51 : f32 to vector<1x16xf32>
    %152 = arith.subf %151, %144 : vector<1x16xf32>
    %153 = arith.mulf %152, %150 : vector<1x16xf32>
    %154 = arith.mulf %144, %122 : vector<1x16xf32>
    %155 = arith.addf %153, %154 : vector<1x16xf32>
    %c4 = arith.constant 4 : index
    %c0_52 = arith.constant 0 : index
    %156 = vector.load %arg3[%c4, %c0_52] : memref<8x48xf32, #tpu.memory_space<vmem>>, vector<1x48xf32>
    %cst_53 = arith.constant dense<0.000000e+00> : vector<1x48xf32>
    %157 = tpu.matmul %155, %2, %cst_53 {dimension_numbers = #tpu.dot_dimension_numbers<[1], [0], [0], [1], [0, 0, 1, 1], [], []>} : vector<1x16xf32>, vector<16x48xf32>, vector<1x48xf32> -> vector<1x48xf32>
    %158 = vector.extract_strided_slice %156 {offsets = [0, 0], sizes = [1, 16], strides = [1, 1]} : vector<1x48xf32> to vector<1x16xf32>
    %159 = vector.extract_strided_slice %157 {offsets = [0, 0], sizes = [1, 16], strides = [1, 1]} : vector<1x48xf32> to vector<1x16xf32>
    %160 = arith.addf %158, %159 : vector<1x16xf32>
    %cst_54 = arith.constant 5.000000e-01 : f32
    %161 = vector.broadcast %cst_54 : f32 to vector<1x16xf32>
    %162 = arith.mulf %161, %160 : vector<1x16xf32>
    %163 = math.tanh %162 : vector<1x16xf32>
    %cst_55 = arith.constant 5.000000e-01 : f32
    %164 = vector.broadcast %cst_55 : f32 to vector<1x16xf32>
    %165 = arith.mulf %164, %163 : vector<1x16xf32>
    %cst_56 = arith.constant 5.000000e-01 : f32
    %166 = vector.broadcast %cst_56 : f32 to vector<1x16xf32>
    %167 = arith.addf %165, %166 : vector<1x16xf32>
    %168 = vector.extract_strided_slice %156 {offsets = [0, 16], sizes = [1, 16], strides = [1, 1]} : vector<1x48xf32> to vector<1x16xf32>
    %169 = vector.extract_strided_slice %157 {offsets = [0, 16], sizes = [1, 16], strides = [1, 1]} : vector<1x48xf32> to vector<1x16xf32>
    %170 = arith.addf %168, %169 : vector<1x16xf32>
    %cst_57 = arith.constant 5.000000e-01 : f32
    %171 = vector.broadcast %cst_57 : f32 to vector<1x16xf32>
    %172 = arith.mulf %171, %170 : vector<1x16xf32>
    %173 = math.tanh %172 : vector<1x16xf32>
    %cst_58 = arith.constant 5.000000e-01 : f32
    %174 = vector.broadcast %cst_58 : f32 to vector<1x16xf32>
    %175 = arith.mulf %174, %173 : vector<1x16xf32>
    %cst_59 = arith.constant 5.000000e-01 : f32
    %176 = vector.broadcast %cst_59 : f32 to vector<1x16xf32>
    %177 = arith.addf %175, %176 : vector<1x16xf32>
    %178 = vector.extract_strided_slice %156 {offsets = [0, 32], sizes = [1, 16], strides = [1, 1]} : vector<1x48xf32> to vector<1x16xf32>
    %179 = vector.extract_strided_slice %157 {offsets = [0, 32], sizes = [1, 16], strides = [1, 1]} : vector<1x48xf32> to vector<1x16xf32>
    %180 = arith.addf %179, %8 : vector<1x16xf32>
    %181 = arith.mulf %167, %180 : vector<1x16xf32>
    %182 = arith.addf %178, %181 : vector<1x16xf32>
    %183 = math.tanh %182 : vector<1x16xf32>
    %cst_60 = arith.constant 1.000000e+00 : f32
    %184 = vector.broadcast %cst_60 : f32 to vector<1x16xf32>
    %185 = arith.subf %184, %177 : vector<1x16xf32>
    %186 = arith.mulf %185, %183 : vector<1x16xf32>
    %187 = arith.mulf %177, %155 : vector<1x16xf32>
    %188 = arith.addf %186, %187 : vector<1x16xf32>
    %c5 = arith.constant 5 : index
    %c0_61 = arith.constant 0 : index
    %189 = vector.load %arg3[%c5, %c0_61] : memref<8x48xf32, #tpu.memory_space<vmem>>, vector<1x48xf32>
    %cst_62 = arith.constant dense<0.000000e+00> : vector<1x48xf32>
    %190 = tpu.matmul %188, %2, %cst_62 {dimension_numbers = #tpu.dot_dimension_numbers<[1], [0], [0], [1], [0, 0, 1, 1], [], []>} : vector<1x16xf32>, vector<16x48xf32>, vector<1x48xf32> -> vector<1x48xf32>
    %191 = vector.extract_strided_slice %189 {offsets = [0, 0], sizes = [1, 16], strides = [1, 1]} : vector<1x48xf32> to vector<1x16xf32>
    %192 = vector.extract_strided_slice %190 {offsets = [0, 0], sizes = [1, 16], strides = [1, 1]} : vector<1x48xf32> to vector<1x16xf32>
    %193 = arith.addf %191, %192 : vector<1x16xf32>
    %cst_63 = arith.constant 5.000000e-01 : f32
    %194 = vector.broadcast %cst_63 : f32 to vector<1x16xf32>
    %195 = arith.mulf %194, %193 : vector<1x16xf32>
    %196 = math.tanh %195 : vector<1x16xf32>
    %cst_64 = arith.constant 5.000000e-01 : f32
    %197 = vector.broadcast %cst_64 : f32 to vector<1x16xf32>
    %198 = arith.mulf %197, %196 : vector<1x16xf32>
    %cst_65 = arith.constant 5.000000e-01 : f32
    %199 = vector.broadcast %cst_65 : f32 to vector<1x16xf32>
    %200 = arith.addf %198, %199 : vector<1x16xf32>
    %201 = vector.extract_strided_slice %189 {offsets = [0, 16], sizes = [1, 16], strides = [1, 1]} : vector<1x48xf32> to vector<1x16xf32>
    %202 = vector.extract_strided_slice %190 {offsets = [0, 16], sizes = [1, 16], strides = [1, 1]} : vector<1x48xf32> to vector<1x16xf32>
    %203 = arith.addf %201, %202 : vector<1x16xf32>
    %cst_66 = arith.constant 5.000000e-01 : f32
    %204 = vector.broadcast %cst_66 : f32 to vector<1x16xf32>
    %205 = arith.mulf %204, %203 : vector<1x16xf32>
    %206 = math.tanh %205 : vector<1x16xf32>
    %cst_67 = arith.constant 5.000000e-01 : f32
    %207 = vector.broadcast %cst_67 : f32 to vector<1x16xf32>
    %208 = arith.mulf %207, %206 : vector<1x16xf32>
    %cst_68 = arith.constant 5.000000e-01 : f32
    %209 = vector.broadcast %cst_68 : f32 to vector<1x16xf32>
    %210 = arith.addf %208, %209 : vector<1x16xf32>
    %211 = vector.extract_strided_slice %189 {offsets = [0, 32], sizes = [1, 16], strides = [1, 1]} : vector<1x48xf32> to vector<1x16xf32>
    %212 = vector.extract_strided_slice %190 {offsets = [0, 32], sizes = [1, 16], strides = [1, 1]} : vector<1x48xf32> to vector<1x16xf32>
    %213 = arith.addf %212, %8 : vector<1x16xf32>
    %214 = arith.mulf %200, %213 : vector<1x16xf32>
    %215 = arith.addf %211, %214 : vector<1x16xf32>
    %216 = math.tanh %215 : vector<1x16xf32>
    %cst_69 = arith.constant 1.000000e+00 : f32
    %217 = vector.broadcast %cst_69 : f32 to vector<1x16xf32>
    %218 = arith.subf %217, %210 : vector<1x16xf32>
    %219 = arith.mulf %218, %216 : vector<1x16xf32>
    %220 = arith.mulf %210, %188 : vector<1x16xf32>
    %221 = arith.addf %219, %220 : vector<1x16xf32>
    %c6 = arith.constant 6 : index
    %c0_70 = arith.constant 0 : index
    %222 = vector.load %arg3[%c6, %c0_70] : memref<8x48xf32, #tpu.memory_space<vmem>>, vector<1x48xf32>
    %cst_71 = arith.constant dense<0.000000e+00> : vector<1x48xf32>
    %223 = tpu.matmul %221, %2, %cst_71 {dimension_numbers = #tpu.dot_dimension_numbers<[1], [0], [0], [1], [0, 0, 1, 1], [], []>} : vector<1x16xf32>, vector<16x48xf32>, vector<1x48xf32> -> vector<1x48xf32>
    %224 = vector.extract_strided_slice %222 {offsets = [0, 0], sizes = [1, 16], strides = [1, 1]} : vector<1x48xf32> to vector<1x16xf32>
    %225 = vector.extract_strided_slice %223 {offsets = [0, 0], sizes = [1, 16], strides = [1, 1]} : vector<1x48xf32> to vector<1x16xf32>
    %226 = arith.addf %224, %225 : vector<1x16xf32>
    %cst_72 = arith.constant 5.000000e-01 : f32
    %227 = vector.broadcast %cst_72 : f32 to vector<1x16xf32>
    %228 = arith.mulf %227, %226 : vector<1x16xf32>
    %229 = math.tanh %228 : vector<1x16xf32>
    %cst_73 = arith.constant 5.000000e-01 : f32
    %230 = vector.broadcast %cst_73 : f32 to vector<1x16xf32>
    %231 = arith.mulf %230, %229 : vector<1x16xf32>
    %cst_74 = arith.constant 5.000000e-01 : f32
    %232 = vector.broadcast %cst_74 : f32 to vector<1x16xf32>
    %233 = arith.addf %231, %232 : vector<1x16xf32>
    %234 = vector.extract_strided_slice %222 {offsets = [0, 16], sizes = [1, 16], strides = [1, 1]} : vector<1x48xf32> to vector<1x16xf32>
    %235 = vector.extract_strided_slice %223 {offsets = [0, 16], sizes = [1, 16], strides = [1, 1]} : vector<1x48xf32> to vector<1x16xf32>
    %236 = arith.addf %234, %235 : vector<1x16xf32>
    %cst_75 = arith.constant 5.000000e-01 : f32
    %237 = vector.broadcast %cst_75 : f32 to vector<1x16xf32>
    %238 = arith.mulf %237, %236 : vector<1x16xf32>
    %239 = math.tanh %238 : vector<1x16xf32>
    %cst_76 = arith.constant 5.000000e-01 : f32
    %240 = vector.broadcast %cst_76 : f32 to vector<1x16xf32>
    %241 = arith.mulf %240, %239 : vector<1x16xf32>
    %cst_77 = arith.constant 5.000000e-01 : f32
    %242 = vector.broadcast %cst_77 : f32 to vector<1x16xf32>
    %243 = arith.addf %241, %242 : vector<1x16xf32>
    %244 = vector.extract_strided_slice %222 {offsets = [0, 32], sizes = [1, 16], strides = [1, 1]} : vector<1x48xf32> to vector<1x16xf32>
    %245 = vector.extract_strided_slice %223 {offsets = [0, 32], sizes = [1, 16], strides = [1, 1]} : vector<1x48xf32> to vector<1x16xf32>
    %246 = arith.addf %245, %8 : vector<1x16xf32>
    %247 = arith.mulf %233, %246 : vector<1x16xf32>
    %248 = arith.addf %244, %247 : vector<1x16xf32>
    %249 = math.tanh %248 : vector<1x16xf32>
    %cst_78 = arith.constant 1.000000e+00 : f32
    %250 = vector.broadcast %cst_78 : f32 to vector<1x16xf32>
    %251 = arith.subf %250, %243 : vector<1x16xf32>
    %252 = arith.mulf %251, %249 : vector<1x16xf32>
    %253 = arith.mulf %243, %221 : vector<1x16xf32>
    %254 = arith.addf %252, %253 : vector<1x16xf32>
    %c7 = arith.constant 7 : index
    %c0_79 = arith.constant 0 : index
    %255 = vector.load %arg3[%c7, %c0_79] : memref<8x48xf32, #tpu.memory_space<vmem>>, vector<1x48xf32>
    %cst_80 = arith.constant dense<0.000000e+00> : vector<1x48xf32>
    %256 = tpu.matmul %254, %2, %cst_80 {dimension_numbers = #tpu.dot_dimension_numbers<[1], [0], [0], [1], [0, 0, 1, 1], [], []>} : vector<1x16xf32>, vector<16x48xf32>, vector<1x48xf32> -> vector<1x48xf32>
    %257 = vector.extract_strided_slice %255 {offsets = [0, 0], sizes = [1, 16], strides = [1, 1]} : vector<1x48xf32> to vector<1x16xf32>
    %258 = vector.extract_strided_slice %256 {offsets = [0, 0], sizes = [1, 16], strides = [1, 1]} : vector<1x48xf32> to vector<1x16xf32>
    %259 = arith.addf %257, %258 : vector<1x16xf32>
    %cst_81 = arith.constant 5.000000e-01 : f32
    %260 = vector.broadcast %cst_81 : f32 to vector<1x16xf32>
    %261 = arith.mulf %260, %259 : vector<1x16xf32>
    %262 = math.tanh %261 : vector<1x16xf32>
    %cst_82 = arith.constant 5.000000e-01 : f32
    %263 = vector.broadcast %cst_82 : f32 to vector<1x16xf32>
    %264 = arith.mulf %263, %262 : vector<1x16xf32>
    %cst_83 = arith.constant 5.000000e-01 : f32
    %265 = vector.broadcast %cst_83 : f32 to vector<1x16xf32>
    %266 = arith.addf %264, %265 : vector<1x16xf32>
    %267 = vector.extract_strided_slice %255 {offsets = [0, 16], sizes = [1, 16], strides = [1, 1]} : vector<1x48xf32> to vector<1x16xf32>
    %268 = vector.extract_strided_slice %256 {offsets = [0, 16], sizes = [1, 16], strides = [1, 1]} : vector<1x48xf32> to vector<1x16xf32>
    %269 = arith.addf %267, %268 : vector<1x16xf32>
    %cst_84 = arith.constant 5.000000e-01 : f32
    %270 = vector.broadcast %cst_84 : f32 to vector<1x16xf32>
    %271 = arith.mulf %270, %269 : vector<1x16xf32>
    %272 = math.tanh %271 : vector<1x16xf32>
    %cst_85 = arith.constant 5.000000e-01 : f32
    %273 = vector.broadcast %cst_85 : f32 to vector<1x16xf32>
    %274 = arith.mulf %273, %272 : vector<1x16xf32>
    %cst_86 = arith.constant 5.000000e-01 : f32
    %275 = vector.broadcast %cst_86 : f32 to vector<1x16xf32>
    %276 = arith.addf %274, %275 : vector<1x16xf32>
    %277 = vector.extract_strided_slice %255 {offsets = [0, 32], sizes = [1, 16], strides = [1, 1]} : vector<1x48xf32> to vector<1x16xf32>
    %278 = vector.extract_strided_slice %256 {offsets = [0, 32], sizes = [1, 16], strides = [1, 1]} : vector<1x48xf32> to vector<1x16xf32>
    %279 = arith.addf %278, %8 : vector<1x16xf32>
    %280 = arith.mulf %266, %279 : vector<1x16xf32>
    %281 = arith.addf %277, %280 : vector<1x16xf32>
    %282 = math.tanh %281 : vector<1x16xf32>
    %cst_87 = arith.constant 1.000000e+00 : f32
    %283 = vector.broadcast %cst_87 : f32 to vector<1x16xf32>
    %284 = arith.subf %283, %276 : vector<1x16xf32>
    %285 = arith.mulf %284, %282 : vector<1x16xf32>
    %286 = arith.mulf %276, %254 : vector<1x16xf32>
    %287 = arith.addf %285, %286 : vector<1x16xf32>
    %288 = tpu.concatenate %254, %287 in 0 : vector<1x16xf32>, vector<1x16xf32> -> vector<2x16xf32>
    %289 = arith.mulf %288, %18 : vector<2x16xf32>
    %cst_88 = arith.constant dense<0.000000e+00> : vector<2xf32>
    %290 = vector.multi_reduction <add>, %289, %cst_88 [1] : vector<2x16xf32> to vector<2xf32>
    %291 = vector.shape_cast %290 : vector<2xf32> to vector<2x1xf32>
    %cst_89 = arith.constant 5.000000e-01 : f32
    %292 = vector.broadcast %cst_89 : f32 to vector<2x1xf32>
    %293 = arith.mulf %292, %291 : vector<2x1xf32>
    %294 = math.tanh %293 : vector<2x1xf32>
    %cst_90 = arith.constant 5.000000e-01 : f32
    %295 = vector.broadcast %cst_90 : f32 to vector<2x1xf32>
    %296 = arith.mulf %295, %294 : vector<2x1xf32>
    %cst_91 = arith.constant 5.000000e-01 : f32
    %297 = vector.broadcast %cst_91 : f32 to vector<2x1xf32>
    %298 = arith.addf %296, %297 : vector<2x1xf32>
    %c0_92 = arith.constant 0 : index
    %c0_93 = arith.constant 0 : index
    %299 = vector.load %arg2[%c0_92, %c0_93] : memref<2x1xf32, #tpu.memory_space<vmem>>, vector<2x1xf32>
    tpu.vector_store %arg2[%c0_92, %c0_93], %298 {strides = array<i32>} : memref<2x1xf32, #tpu.memory_space<vmem>>, vector<2x1xf32>,
    return
  }
}

</mosaic_0001>

<llo_original>
// kernel: cpc_net_forward.1
$region0: #{cpc_net_forward.1}
  #allocation0 [shape = 'u32[]', space=smem, size = 0x4, offset = 0x4, fixed_abs, tag = 'smem constant byte address 0x4 - core index']
  #allocation1 [shape = 'u32[144,128]{1,0:T(1,128)}', space=vmem, size = 0x12000, scoped, tag = 'internal scratch']
  #allocation2 [shape = 'f32[8,48]{1,0:T(8,128)}', space=vmem, size = 0x1000, scoped, tag = 'scratch operand']
  %s0 = inlined_call_operand.vmem [shape: f32[14,32], index: 0, kind: input, shape index: {}]
  %s1 = inlined_call_operand.vmem [shape: f32[80,128], index: 1, kind: input, shape index: {}]
  %s2 = inlined_call_operand.vmem [shape: f32[2,1], index: 2, kind: output, shape index: {}]
  %s3 = sld [smem:[#allocation0]]
  $region18: #{cpc_net_forward.1} parent=0
    _
  %s5 = ssub.s32 1, %s3
  %s6 = scalar_select 0, %s5, %s3
  // Predicated region
  $region2: #{cpc_net_forward.1} parent=0 // pred_check
    _
  $region3: #{cpc_net_forward.1} parent=0 // pred_check_branch
    %8 = sbr.rel (0) target = $region5
  $region4: #{cpc_net_forward.1} parent=0 // pred_region
    _
  $region5: #{cpc_net_forward.1} parent=0 // pred_fallthru
    _
  // Predicated region
  $region6: #{cpc_net_forward.1} parent=0 // pred_check
    _
  $region7: #{cpc_net_forward.1} parent=0 // pred_check_branch
    %10 = sbr.rel (0) target = $region9
  $region8: #{cpc_net_forward.1} parent=0 // pred_region
    _
  $region9: #{cpc_net_forward.1} parent=0 // pred_fallthru
    _
  %v11 = vld [vmem:[%s1] sm:$0xff]
  %v12 = vld [vmem:[%s1 + $0x8] sm:$0xff]
  %v13 = vld [vmem:[%s1 + $0x10] sm:$0xff]
  %v14 = vld [vmem:[%s1 + $0x18] sm:$0xff]
  %v15 = vld [vmem:[%s1 + $0x20] sm:$0xff]
  %v16 = vld [vmem:[%s1 + $0x28] sm:$0xff]
  %v17 = vld [vmem:[%s1 + $0x30] sm:$0xff]
  %v18 = vld [vmem:[%s1 + $0x38] sm:$0xff]
  %v19 = vld [vmem:[%s1 + $0x40] sm:$0x3]
  %v20 = vld [vmem:[%s1 + $0x48] sm:$0x1]
  %v21 = vld [vmem:[%s0] sm:$0xff]
  %v22 = vld [vmem:[%s0 + $0x8] sm:$0x3f]
  %v23 = vlaneseq
  %v24 = vshrl.u32 %v23, 7
  %v25 = vsub.s32 0, %v24
  %v26 = vrot.slane %v20, %v25
  %vm27 = vcmask 261120
  %v29 = vsel %vm27, %v21, 0
  %v32 = vsel %vm27, %v22, 0
  %34 = vmatprep.subr.mxu0 0.0
  %35 = vmatpush1.msra.mxu0 %v11
  %36 = vmatprep.subr.mxu0 0.0
  %37 = vmatpush1.msra.mxu0 %v12
  %38 = vmatprep.subr.mxu0 0.0
  %39 = vmatpush1.msra.mxu0 %v13
  %40 = vmatprep.subr.mxu0 0.0
  %41 = vmatpush1.msra.mxu0 %v14
  %42 = vmatprep.subr.mxu0 0.0
  %43 = vmatpush1.msra.mxu0 0.0
  %44 = vmatprep.subr.mxu0 0.0
  %45 = vmatpush1.msra.mxu0 0.0
  %46 = vmatprep.subr.mxu0 0.0
  %47 = vmatpush1.msra.mxu0 0.0
  %48 = vmatprep.subr.mxu0 0.0
  %49 = vmatpush1.msra.mxu0 0.0
  %50 = vmatprep.subr.mxu0 0.0
  %51 = vmatpush1.msra.mxu0 0.0
  %52 = vmatprep.subr.mxu0 0.0
  %53 = vmatpush1.msra.mxu0 0.0
  %54 = vmatprep.subr.mxu0 0.0
  %55 = vmatpush1.msra.mxu0 0.0
  %56 = vmatprep.subr.mxu0 0.0
  %57 = vmatpush1.msra.mxu0 0.0
  %58 = vmatprep.subr.mxu0 0.0
  %59 = vmatpush1.msra.mxu0 0.0
  %60 = vmatprep.subr.mxu0 0.0
  %61 = vmatpush1.msra.mxu0 0.0
  %62 = vmatprep.subr.mxu0 0.0
  %63 = vmatpush1.msra.mxu0 0.0
  %64 = vmatprep.subr.mxu0 0.0
  %65 = vmatpush1.msra.mxu0 0.0
  %66 = vmatprep.subr.mxu0 0.0
  %67 = vmatpush1.msra.mxu0 0.0
  %68 = vmatprep.subr.mxu0 0.0
  %69 = vmatpush1.msra.mxu0 0.0
  %70 = vmatprep.subr.mxu0 0.0
  %71 = vmatpush1.msra.mxu0 0.0
  %72 = vmatprep.subr.mxu0 0.0
  %73 = vmatpush1.msra.mxu0 0.0
  %74 = vmatprep.subr.mxu0 0.0
  %75 = vmatpush1.msra.mxu0 0.0
  %76 = vmatprep.subr.mxu0 0.0
  %77 = vmatpush1.msra.mxu0 0.0
  %78 = vmatprep.subr.mxu0 0.0
  %79 = vmatpush1.msra.mxu0 0.0
  %80 = vmatprep.subr.mxu0 0.0
  %81 = vmatpush1.msra.mxu0 0.0
  %82 = vmatprep.subr.mxu0 0.0
  %83 = vmatpush1.msra.mxu0 0.0
  %84 = vmatprep.subr.mxu0 0.0
  %85 = vmatpush1.msra.mxu0 0.0
  %86 = vmatprep.subr.mxu0 0.0
  %87 = vmatpush1.msra.mxu0 0.0
  %88 = vmatprep.subr.mxu0 0.0
  %89 = vmatpush1.msra.mxu0 0.0
  %90 = vmatprep.subr.mxu0 0.0
  %91 = vmatpush1.msra.mxu0 0.0
  %92 = vmatprep.subr.mxu0 0.0
  %93 = vmatpush1.msra.mxu0 0.0
  %94 = vmatprep.subr.mxu0 0.0
  %95 = vmatpush1.msra.mxu0 0.0
  %96 = vmatprep.subr.mxu0 0.0
  %97 = vmatpush1.msra.mxu0 0.0
  %98 = vmatprep.mubr.f32.mxu0 0.0
  %99 = vmatmul.mubr.f32.gmra.mrb[0].mxu0 %v29
  %v100 = vpop.f32.mrb[0].mxu0
  %v101 = vadd.f32 %v26, %v100
  %v102 = vpop.f32.mrb[0].mxu0
  %103 = vmatprep.mubr.f32.mxu0 0.0
  %104 = vmatmul.mubr.f32.gmra.mrb[0].mxu0 %v32
  %v105 = vpop.f32.mrb[0].mxu0
  %v106 = vadd.f32 %v26, %v105
  %v107 = vpop.f32.mrb[0].mxu0
  %108 = vdwg.mxu0
  %v109 = vmax.f32 %v101, 0.0
  %v110 = vmax.f32 %v106, 0.0
  %vm111 = vcmask 48128
  %v113 = vsel %vm111, %v19, 0
  %vm115 = vcmask 1045504
  %v117 = vsel %vm115, %v110, 0
  %119 = vmatprep.subr.mxu0 0.0
  %120 = vmatpush1.msra.mxu0 %v117
  %121 = vmatprep.subr.mxu0 0.0
  %122 = vmatpush1.msra.mxu0 0.0
  %123 = vmatprep.subr.mxu0 0.0
  %124 = vmatpush1.msra.mxu0 0.0
  %125 = vmatprep.subr.mxu0 0.0
  %126 = vmatpush1.msra.mxu0 0.0
  %127 = vmatprep.subr.mxu0 0.0
  %128 = vmatpush1.msra.mxu0 0.0
  %129 = vmatprep.subr.mxu0 0.0
  %130 = vmatpush1.msra.mxu0 0.0
  %131 = vmatprep.subr.mxu0 0.0
  %132 = vmatpush1.msra.mxu0 0.0
  %133 = vmatprep.subr.mxu0 0.0
  %134 = vmatpush1.msra.mxu0 0.0
  %135 = vmatprep.subr.mxu0 0.0
  %136 = vmatpush1.msra.mxu0 0.0
  %137 = vmatprep.subr.mxu0 0.0
  %138 = vmatpush1.msra.mxu0 0.0
  %139 = vmatprep.subr.mxu0 0.0
  %140 = vmatpush1.msra.mxu0 0.0
  %141 = vmatprep.subr.mxu0 0.0
  %142 = vmatpush1.msra.mxu0 0.0
  %143 = vmatprep.subr.mxu0 0.0
  %144 = vmatpush1.msra.mxu0 0.0
  %145 = vmatprep.subr.mxu0 0.0
  %146 = vmatpush1.msra.mxu0 0.0
  %147 = vmatprep.subr.mxu0 0.0
  %148 = vmatpush1.msra.mxu0 0.0
  %149 = vmatprep.subr.mxu0 0.0
  %150 = vmatpush1.msra.mxu0 0.0
  %151 = vmatprep.subr.mxu0 0.0
  %152 = vmatpush1.msra.mxu0 0.0
  %153 = vmatprep.subr.mxu0 0.0
  %154 = vmatpush1.msra.mxu0 0.0
  %155 = vmatprep.subr.mxu0 0.0
  %156 = vmatpush1.msra.mxu0 0.0
  %157 = vmatprep.subr.mxu0 0.0
  %158 = vmatpush1.msra.mxu0 0.0
  %159 = vmatprep.subr.mxu0 0.0
  %160 = vmatpush1.msra.mxu0 0.0
  %161 = vmatprep.subr.mxu0 0.0
  %162 = vmatpush1.msra.mxu0 0.0
  %163 = vmatprep.subr.mxu0 0.0
  %164 = vmatpush1.msra.mxu0 0.0
  %165 = vmatprep.subr.mxu0 0.0
  %166 = vmatpush1.msra.mxu0 0.0
  %167 = vmatprep.subr.mxu0 0.0
  %168 = vmatpush1.msra.mxu0 0.0
  %169 = vmatprep.subr.mxu0 0.0
  %170 = vmatpush1.msra.mxu0 0.0
  %171 = vmatprep.subr.mxu0 0.0
  %172 = vmatpush1.msra.mxu0 0.0
  %173 = vmatprep.subr.mxu0 0.0
  %174 = vmatpush1.msra.mxu0 0.0
  %175 = vmatprep.subr.mxu0 0.0
  %176 = vmatpush1.msra.mxu0 0.0
  %177 = vmatprep.subr.mxu0 0.0
  %178 = vmatpush1.msra.mxu0 0.0
  %179 = vmatprep.subr.mxu0 0.0
  %180 = vmatpush1.msra.mxu0 0.0
  %181 = vmatprep.subr.mxu0 0.0
  %182 = vmatpush1.msra.mxu0 0.0
  %183 = vmatprep.mubr.f32.mxu0 0.0
  %184 = vmatmul.mubr.f32.gmra.mrb[0].mxu0 %v113
  %v185 = vpop.f32.mrb[0].mxu0
  %v186 = vadd.f32 0.0, %v185
  %v187 = vpop.f32.mrb[0].mxu0
  %188 = vdwg.mxu0
  %vm189 = vcmask 64512
  %v191 = vsel %vm189, %v186, 0
  %193 = vmatprep.subr.mxu0 0.0
  %194 = vmatpush1.msra.mxu0 %v18
  %195 = vmatprep.subr.mxu0 0.0
  %196 = vmatpush1.msra.mxu0 0.0
  %197 = vmatprep.subr.mxu0 0.0
  %198 = vmatpush1.msra.mxu0 0.0
  %199 = vmatprep.subr.mxu0 0.0
  %200 = vmatpush1.msra.mxu0 0.0
  %201 = vmatprep.subr.mxu0 0.0
  %202 = vmatpush1.msra.mxu0 0.0
  %203 = vmatprep.subr.mxu0 0.0
  %204 = vmatpush1.msra.mxu0 0.0
  %205 = vmatprep.subr.mxu0 0.0
  %206 = vmatpush1.msra.mxu0 0.0
  %207 = vmatprep.subr.mxu0 0.0
  %208 = vmatpush1.msra.mxu0 0.0
  %209 = vmatprep.subr.mxu0 0.0
  %210 = vmatpush1.msra.mxu0 0.0
  %211 = vmatprep.subr.mxu0 0.0
  %212 = vmatpush1.msra.mxu0 0.0
  %213 = vmatprep.subr.mxu0 0.0
  %214 = vmatpush1.msra.mxu0 0.0
  %215 = vmatprep.subr.mxu0 0.0
  %216 = vmatpush1.msra.mxu0 0.0
  %217 = vmatprep.subr.mxu0 0.0
  %218 = vmatpush1.msra.mxu0 0.0
  %219 = vmatprep.subr.mxu0 0.0
  %220 = vmatpush1.msra.mxu0 0.0
  %221 = vmatprep.subr.mxu0 0.0
  %222 = vmatpush1.msra.mxu0 0.0
  %223 = vmatprep.subr.mxu0 0.0
  %224 = vmatpush1.msra.mxu0 0.0
  %225 = vmatprep.subr.mxu0 0.0
  %226 = vmatpush1.msra.mxu0 0.0
  %227 = vmatprep.subr.mxu0 0.0
  %228 = vmatpush1.msra.mxu0 0.0
  %229 = vmatprep.subr.mxu0 0.0
  %230 = vmatpush1.msra.mxu0 0.0
  %231 = vmatprep.subr.mxu0 0.0
  %232 = vmatpush1.msra.mxu0 0.0
  %233 = vmatprep.subr.mxu0 0.0
  %234 = vmatpush1.msra.mxu0 0.0
  %235 = vmatprep.subr.mxu0 0.0
  %236 = vmatpush1.msra.mxu0 0.0
  %237 = vmatprep.subr.mxu0 0.0
  %238 = vmatpush1.msra.mxu0 0.0
  %239 = vmatprep.subr.mxu0 0.0
  %240 = vmatpush1.msra.mxu0 0.0
  %241 = vmatprep.subr.mxu0 0.0
  %242 = vmatpush1.msra.mxu0 0.0
  %243 = vmatprep.subr.mxu0 0.0
  %244 = vmatpush1.msra.mxu0 0.0
  %245 = vmatprep.subr.mxu0 0.0
  %246 = vmatpush1.msra.mxu0 0.0
  %247 = vmatprep.subr.mxu0 0.0
  %248 = vmatpush1.msra.mxu0 0.0
  %249 = vmatprep.subr.mxu0 0.0
  %250 = vmatpush1.msra.mxu0 0.0
  %251 = vmatprep.subr.mxu0 0.0
  %252 = vmatpush1.msra.mxu0 0.0
  %253 = vmatprep.subr.mxu0 0.0
  %254 = vmatpush1.msra.mxu0 0.0
  %255 = vmatprep.subr.mxu0 0.0
  %256 = vmatpush1.msra.mxu0 0.0
  %257 = vmatprep.mubr.f32.mxu0 0.0
  %258 = vmatmul.mubr.f32.gmra.mrb[0].mxu0 %v191
  %v259 = vpop.f32.mrb[0].mxu0
  %v260 = vadd.f32 0.0, %v259
  %v261 = vpop.f32.mrb[0].mxu0
  %262 = vdwg.mxu0
  %264 = vrot.lane.b32.xlu0 %v26, 120
  %v265 = vpop.permute.xlu0 %264
  %v268 = vsel %vm189, %v109, 0
  %270 = vmatprep.subr.mxu0 0.0
  %271 = vmatpush1.msra.mxu0 %v15
  %272 = vmatprep.subr.mxu0 0.0
  %273 = vmatpush1.msra.mxu0 0.0
  %274 = vmatprep.subr.mxu0 0.0
  %275 = vmatpush1.msra.mxu0 0.0
  %276 = vmatprep.subr.mxu0 0.0
  %277 = vmatpush1.msra.mxu0 0.0
  %278 = vmatprep.subr.mxu0 0.0
  %279 = vmatpush1.msra.mxu0 0.0
  %280 = vmatprep.subr.mxu0 0.0
  %281 = vmatpush1.msra.mxu0 0.0
  %282 = vmatprep.subr.mxu0 0.0
  %283 = vmatpush1.msra.mxu0 0.0
  %284 = vmatprep.subr.mxu0 0.0
  %285 = vmatpush1.msra.mxu0 0.0
  %286 = vmatprep.subr.mxu0 0.0
  %287 = vmatpush1.msra.mxu0 0.0
  %288 = vmatprep.subr.mxu0 0.0
  %289 = vmatpush1.msra.mxu0 0.0
  %290 = vmatprep.subr.mxu0 0.0
  %291 = vmatpush1.msra.mxu0 0.0
  %292 = vmatprep.subr.mxu0 0.0
  %293 = vmatpush1.msra.mxu0 0.0
  %294 = vmatprep.subr.mxu0 0.0
  %295 = vmatpush1.msra.mxu0 0.0
  %296 = vmatprep.subr.mxu0 0.0
  %297 = vmatpush1.msra.mxu0 0.0
  %298 = vmatprep.subr.mxu0 0.0
  %299 = vmatpush1.msra.mxu0 0.0
  %300 = vmatprep.subr.mxu0 0.0
  %301 = vmatpush1.msra.mxu0 0.0
  %302 = vmatprep.subr.mxu0 0.0
  %303 = vmatpush1.msra.mxu0 0.0
  %304 = vmatprep.subr.mxu0 0.0
  %305 = vmatpush1.msra.mxu0 0.0
  %306 = vmatprep.subr.mxu0 0.0
  %307 = vmatpush1.msra.mxu0 0.0
  %308 = vmatprep.subr.mxu0 0.0
  %309 = vmatpush1.msra.mxu0 0.0
  %310 = vmatprep.subr.mxu0 0.0
  %311 = vmatpush1.msra.mxu0 0.0
  %312 = vmatprep.subr.mxu0 0.0
  %313 = vmatpush1.msra.mxu0 0.0
  %314 = vmatprep.subr.mxu0 0.0
  %315 = vmatpush1.msra.mxu0 0.0
  %316 = vmatprep.subr.mxu0 0.0
  %317 = vmatpush1.msra.mxu0 0.0
  %318 = vmatprep.subr.mxu0 0.0
  %319 = vmatpush1.msra.mxu0 0.0
  %320 = vmatprep.subr.mxu0 0.0
  %321 = vmatpush1.msra.mxu0 0.0
  %322 = vmatprep.subr.mxu0 0.0
  %323 = vmatpush1.msra.mxu0 0.0
  %324 = vmatprep.subr.mxu0 0.0
  %325 = vmatpush1.msra.mxu0 0.0
  %326 = vmatprep.subr.mxu0 0.0
  %327 = vmatpush1.msra.mxu0 0.0
  %328 = vmatprep.subr.mxu0 0.0
  %329 = vmatpush1.msra.mxu0 0.0
  %330 = vmatprep.subr.mxu0 0.0
  %331 = vmatpush1.msra.mxu0 0.0
  %332 = vmatprep.subr.mxu0 0.0
  %333 = vmatpush1.msra.mxu0 0.0
  %334 = vmatprep.mubr.f32.mxu0 0.0
  %335 = vmatmul.mubr.f32.gmra.mrb[0].mxu0 %v268
  %v336 = vpop.f32.mrb[0].mxu0
  %v337 = vadd.f32 %v265, %v336
  %v338 = vpop.f32.mrb[0].mxu0
  %339 = vdwg.mxu0
  %vm340 = vcmask 392192
  %341 = vst.msk [vmem:[#allocation2] sm:$0xff] %vm340, %v337
  %v342 = vld [vmem:[#allocation2] sm:$0x1]
  %vm343 = vcmask 130048
  %v345 = vsel %vm343, 0.0, 0
  %347 = vmatprep.subr.mxu0 0.0
  %348 = vmatpush1.msra.mxu0 %v16
  %349 = vmatprep.subr.mxu0 0.0
  %350 = vmatpush1.msra.mxu0 %v17
  %351 = vmatprep.subr.mxu0 0.0
  %352 = vmatpush1.msra.mxu0 0.0
  %353 = vmatprep.subr.mxu0 0.0
  %354 = vmatpush1.msra.mxu0 0.0
  %355 = vmatprep.subr.mxu0 0.0
  %356 = vmatpush1.msra.mxu0 0.0
  %357 = vmatprep.subr.mxu0 0.0
  %358 = vmatpush1.msra.mxu0 0.0
  %359 = vmatprep.subr.mxu0 0.0
  %360 = vmatpush1.msra.mxu0 0.0
  %361 = vmatprep.subr.mxu0 0.0
  %362 = vmatpush1.msra.mxu0 0.0
  %363 = vmatprep.subr.mxu0 0.0
  %364 = vmatpush1.msra.mxu0 0.0
  %365 = vmatprep.subr.mxu0 0.0
  %366 = vmatpush1.msra.mxu0 0.0
  %367 = vmatprep.subr.mxu0 0.0
  %368 = vmatpush1.msra.mxu0 0.0
  %369 = vmatprep.subr.mxu0 0.0
  %370 = vmatpush1.msra.mxu0 0.0
  %371 = vmatprep.subr.mxu0 0.0
  %372 = vmatpush1.msra.mxu0 0.0
  %373 = vmatprep.subr.mxu0 0.0
  %374 = vmatpush1.msra.mxu0 0.0
  %375 = vmatprep.subr.mxu0 0.0
  %376 = vmatpush1.msra.mxu0 0.0
  %377 = vmatprep.subr.mxu0 0.0
  %378 = vmatpush1.msra.mxu0 0.0
  %379 = vmatprep.subr.mxu0 0.0
  %380 = vmatpush1.msra.mxu0 0.0
  %381 = vmatprep.subr.mxu0 0.0
  %382 = vmatpush1.msra.mxu0 0.0
  %383 = vmatprep.subr.mxu0 0.0
  %384 = vmatpush1.msra.mxu0 0.0
  %385 = vmatprep.subr.mxu0 0.0
  %386 = vmatpush1.msra.mxu0 0.0
  %387 = vmatprep.subr.mxu0 0.0
  %388 = vmatpush1.msra.mxu0 0.0
  %389 = vmatprep.subr.mxu0 0.0
  %390 = vmatpush1.msra.mxu0 0.0
  %391 = vmatprep.subr.mxu0 0.0
  %392 = vmatpush1.msra.mxu0 0.0
  %393 = vmatprep.subr.mxu0 0.0
  %394 = vmatpush1.msra.mxu0 0.0
  %395 = vmatprep.subr.mxu0 0.0
  %396 = vmatpush1.msra.mxu0 0.0
  %397 = vmatprep.subr.mxu0 0.0
  %398 = vmatpush1.msra.mxu0 0.0
  %399 = vmatprep.subr.mxu0 0.0
  %400 = vmatpush1.msra.mxu0 0.0
  %401 = vmatprep.subr.mxu0 0.0
  %402 = vmatpush1.msra.mxu0 0.0
  %403 = vmatprep.subr.mxu0 0.0
  %404 = vmatpush1.msra.mxu0 0.0
  %405 = vmatprep.subr.mxu0 0.0
  %406 = vmatpush1.msra.mxu0 0.0
  %407 = vmatprep.subr.mxu0 0.0
  %408 = vmatpush1.msra.mxu0 0.0
  %409 = vmatprep.subr.mxu0 0.0
  %410 = vmatpush1.msra.mxu0 0.0
  %411 = vmatprep.mubr.f32.mxu0 0.0
  %412 = vmatmul.mubr.f32.gmra.mrb[0].mxu0 %v345
  %v413 = vpop.f32.mrb[0].mxu0
  %v414 = vadd.f32 0.0, %v413
  %v415 = vpop.f32.mrb[0].mxu0
  %416 = vdwg.mxu0
  %v417 = vadd.f32 %v342, %v414
  %v418 = vmul.f32 %v417, 0.5
  %v419 = vtanh.pop %v418
  %v420 = vmul.f32 %v419, 0.5
  %v421 = vadd.f32 %v420, 0.5
  %423 = vrot.lane.b32.xlu0 %v20, 104
  %v424 = vpop.permute.xlu0 %423
  %v426 = vadd.f32 %v414, %v424
  %428 = vrot.lane.b32.xlu0 %v426, 96
  %v429 = vpop.permute.xlu0 %428
  %v431 = vmul.f32 %v421, %v429
  %433 = vrot.lane.b32.xlu0 %v431, 32
  %v434 = vpop.permute.xlu0 %433
  %v436 = vadd.f32 %v342, %v434
  %v437 = vtanh.pop %v436
  %v438 = vsub.f32 1.0, %v421
  %440 = vrot.lane.b32.xlu0 %v437, 112
  %v441 = vpop.permute.xlu0 %440
  %v443 = vmul.f32 %v438, %v441
  %v444 = vmul.f32 %v421, 0.0
  %v445 = vadd.f32 %v443, %v444
  %v446 = vld [vmem:[#allocation2 + $0x1] sm:$0x1]
  %448 = vrot.lane.b32.xlu0 %v445, 112
  %v449 = vpop.permute.xlu0 %448
  %v450 = vsel %vm343, %v449, 0
  %452 = vmatprep.subr.mxu0 0.0
  %453 = vmatpush1.msra.mxu0 %v16
  %454 = vmatprep.subr.mxu0 0.0
  %455 = vmatpush1.msra.mxu0 %v17
  %456 = vmatprep.subr.mxu0 0.0
  %457 = vmatpush1.msra.mxu0 0.0
  %458 = vmatprep.subr.mxu0 0.0
  %459 = vmatpush1.msra.mxu0 0.0
  %460 = vmatprep.subr.mxu0 0.0
  %461 = vmatpush1.msra.mxu0 0.0
  %462 = vmatprep.subr.mxu0 0.0
  %463 = vmatpush1.msra.mxu0 0.0
  %464 = vmatprep.subr.mxu0 0.0
  %465 = vmatpush1.msra.mxu0 0.0
  %466 = vmatprep.subr.mxu0 0.0
  %467 = vmatpush1.msra.mxu0 0.0
  %468 = vmatprep.subr.mxu0 0.0
  %469 = vmatpush1.msra.mxu0 0.0
  %470 = vmatprep.subr.mxu0 0.0
  %471 = vmatpush1.msra.mxu0 0.0
  %472 = vmatprep.subr.mxu0 0.0
  %473 = vmatpush1.msra.mxu0 0.0
  %474 = vmatprep.subr.mxu0 0.0
  %475 = vmatpush1.msra.mxu0 0.0
  %476 = vmatprep.subr.mxu0 0.0
  %477 = vmatpush1.msra.mxu0 0.0
  %478 = vmatprep.subr.mxu0 0.0
  %479 = vmatpush1.msra.mxu0 0.0
  %480 = vmatprep.subr.mxu0 0.0
  %481 = vmatpush1.msra.mxu0 0.0
  %482 = vmatprep.subr.mxu0 0.0
  %483 = vmatpush1.msra.mxu0 0.0
  %484 = vmatprep.subr.mxu0 0.0
  %485 = vmatpush1.msra.mxu0 0.0
  %486 = vmatprep.subr.mxu0 0.0
  %487 = vmatpush1.msra.mxu0 0.0
  %488 = vmatprep.subr.mxu0 0.0
  %489 = vmatpush1.msra.mxu0 0.0
  %490 = vmatprep.subr.mxu0 0.0
  %491 = vmatpush1.msra.mxu0 0.0
  %492 = vmatprep.subr.mxu0 0.0
  %493 = vmatpush1.msra.mxu0 0.0
  %494 = vmatprep.subr.mxu0 0.0
  %495 = vmatpush1.msra.mxu0 0.0
  %496 = vmatprep.subr.mxu0 0.0
  %497 = vmatpush1.msra.mxu0 0.0
  %498 = vmatprep.subr.mxu0 0.0
  %499 = vmatpush1.msra.mxu0 0.0
  %500 = vmatprep.subr.mxu0 0.0
  %501 = vmatpush1.msra.mxu0 0.0
  %502 = vmatprep.subr.mxu0 0.0
  %503 = vmatpush1.msra.mxu0 0.0
  %504 = vmatprep.subr.mxu0 0.0
  %505 = vmatpush1.msra.mxu0 0.0
  %506 = vmatprep.subr.mxu0 0.0
  %507 = vmatpush1.msra.mxu0 0.0
  %508 = vmatprep.subr.mxu0 0.0
  %509 = vmatpush1.msra.mxu0 0.0
  %510 = vmatprep.subr.mxu0 0.0
  %511 = vmatpush1.msra.mxu0 0.0
  %512 = vmatprep.subr.mxu0 0.0
  %513 = vmatpush1.msra.mxu0 0.0
  %514 = vmatprep.subr.mxu0 0.0
  %515 = vmatpush1.msra.mxu0 0.0
  %516 = vmatprep.mubr.f32.mxu0 0.0
  %517 = vmatmul.mubr.f32.gmra.mrb[0].mxu0 %v450
  %v518 = vpop.f32.mrb[0].mxu0
  %v519 = vadd.f32 0.0, %v518
  %v520 = vpop.f32.mrb[0].mxu0
  %521 = vdwg.mxu0
  %v522 = vadd.f32 %v446, %v519
  %v523 = vmul.f32 %v522, 0.5
  %v524 = vtanh.pop %v523
  %v525 = vmul.f32 %v524, 0.5
  %v526 = vadd.f32 %v525, 0.5
  %v527 = vadd.f32 %v519, %v424
  %529 = vrot.lane.b32.xlu0 %v527, 96
  %v530 = vpop.permute.xlu0 %529
  %v532 = vmul.f32 %v526, %v530
  %534 = vrot.lane.b32.xlu0 %v532, 32
  %v535 = vpop.permute.xlu0 %534
  %v537 = vadd.f32 %v446, %v535
  %v538 = vtanh.pop %v537
  %v539 = vsub.f32 1.0, %v526
  %541 = vrot.lane.b32.xlu0 %v538, 112
  %v542 = vpop.permute.xlu0 %541
  %v544 = vmul.f32 %v539, %v542
  %v545 = vmul.f32 %v526, %v445
  %v546 = vadd.f32 %v544, %v545
  %v547 = vld [vmem:[#allocation2 + $0x2] sm:$0x1]
  %549 = vrot.lane.b32.xlu0 %v546, 112
  %v550 = vpop.permute.xlu0 %549
  %v551 = vsel %vm343, %v550, 0
  %553 = vmatprep.subr.mxu0 0.0
  %554 = vmatpush1.msra.mxu0 %v16
  %555 = vmatprep.subr.mxu0 0.0
  %556 = vmatpush1.msra.mxu0 %v17
  %557 = vmatprep.subr.mxu0 0.0
  %558 = vmatpush1.msra.mxu0 0.0
  %559 = vmatprep.subr.mxu0 0.0
  %560 = vmatpush1.msra.mxu0 0.0
  %561 = vmatprep.subr.mxu0 0.0
  %562 = vmatpush1.msra.mxu0 0.0
  %563 = vmatprep.subr.mxu0 0.0
  %564 = vmatpush1.msra.mxu0 0.0
  %565 = vmatprep.subr.mxu0 0.0
  %566 = vmatpush1.msra.mxu0 0.0
  %567 = vmatprep.subr.mxu0 0.0
  %568 = vmatpush1.msra.mxu0 0.0
  %569 = vmatprep.subr.mxu0 0.0
  %570 = vmatpush1.msra.mxu0 0.0
  %571 = vmatprep.subr.mxu0 0.0
  %572 = vmatpush1.msra.mxu0 0.0
  %573 = vmatprep.subr.mxu0 0.0
  %574 = vmatpush1.msra.mxu0 0.0
  %575 = vmatprep.subr.mxu0 0.0
  %576 = vmatpush1.msra.mxu0 0.0
  %577 = vmatprep.subr.mxu0 0.0
  %578 = vmatpush1.msra.mxu0 0.0
  %579 = vmatprep.subr.mxu0 0.0
  %580 = vmatpush1.msra.mxu0 0.0
  %581 = vmatprep.subr.mxu0 0.0
  %582 = vmatpush1.msra.mxu0 0.0
  %583 = vmatprep.subr.mxu0 0.0
  %584 = vmatpush1.msra.mxu0 0.0
  %585 = vmatprep.subr.mxu0 0.0
  %586 = vmatpush1.msra.mxu0 0.0
  %587 = vmatprep.subr.mxu0 0.0
  %588 = vmatpush1.msra.mxu0 0.0
  %589 = vmatprep.subr.mxu0 0.0
  %590 = vmatpush1.msra.mxu0 0.0
  %591 = vmatprep.subr.mxu0 0.0
  %592 = vmatpush1.msra.mxu0 0.0
  %593 = vmatprep.subr.mxu0 0.0
  %594 = vmatpush1.msra.mxu0 0.0
  %595 = vmatprep.subr.mxu0 0.0
  %596 = vmatpush1.msra.mxu0 0.0
  %597 = vmatprep.subr.mxu0 0.0
  %598 = vmatpush1.msra.mxu0 0.0
  %599 = vmatprep.subr.mxu0 0.0
  %600 = vmatpush1.msra.mxu0 0.0
  %601 = vmatprep.subr.mxu0 0.0
  %602 = vmatpush1.msra.mxu0 0.0
  %603 = vmatprep.subr.mxu0 0.0
  %604 = vmatpush1.msra.mxu0 0.0
  %605 = vmatprep.subr.mxu0 0.0
  %606 = vmatpush1.msra.mxu0 0.0
  %607 = vmatprep.subr.mxu0 0.0
  %608 = vmatpush1.msra.mxu0 0.0
  %609 = vmatprep.subr.mxu0 0.0
  %610 = vmatpush1.msra.mxu0 0.0
  %611 = vmatprep.subr.mxu0 0.0
  %612 = vmatpush1.msra.mxu0 0.0
  %613 = vmatprep.subr.mxu0 0.0
  %614 = vmatpush1.msra.mxu0 0.0
  %615 = vmatprep.subr.mxu0 0.0
  %616 = vmatpush1.msra.mxu0 0.0
  %617 = vmatprep.mubr.f32.mxu0 0.0
  %618 = vmatmul.mubr.f32.gmra.mrb[0].mxu0 %v551
  %v619 = vpop.f32.mrb[0].mxu0
  %v620 = vadd.f32 0.0, %v619
  %v621 = vpop.f32.mrb[0].mxu0
  %622 = vdwg.mxu0
  %v623 = vadd.f32 %v547, %v620
  %v624 = vmul.f32 %v623, 0.5
  %v625 = vtanh.pop %v624
  %v626 = vmul.f32 %v625, 0.5
  %v627 = vadd.f32 %v626, 0.5
  %v628 = vadd.f32 %v620, %v424
  %630 = vrot.lane.b32.xlu0 %v628, 96
  %v631 = vpop.permute.xlu0 %630
  %v633 = vmul.f32 %v627, %v631
  %635 = vrot.lane.b32.xlu0 %v633, 32
  %v636 = vpop.permute.xlu0 %635
  %v638 = vadd.f32 %v547, %v636
  %v639 = vtanh.pop %v638
  %v640 = vsub.f32 1.0, %v627
  %642 = vrot.lane.b32.xlu0 %v639, 112
  %v643 = vpop.permute.xlu0 %642
  %v645 = vmul.f32 %v640, %v643
  %v646 = vmul.f32 %v627, %v546
  %v647 = vadd.f32 %v645, %v646
  %v648 = vld [vmem:[#allocation2 + $0x3] sm:$0x1]
  %650 = vrot.lane.b32.xlu0 %v647, 112
  %v651 = vpop.permute.xlu0 %650
  %v652 = vsel %vm343, %v651, 0
  %654 = vmatprep.subr.mxu0 0.0
  %655 = vmatpush1.msra.mxu0 %v16
  %656 = vmatprep.subr.mxu0 0.0
  %657 = vmatpush1.msra.mxu0 %v17
  %658 = vmatprep.subr.mxu0 0.0
  %659 = vmatpush1.msra.mxu0 0.0
  %660 = vmatprep.subr.mxu0 0.0
  %661 = vmatpush1.msra.mxu0 0.0
  %662 = vmatprep.subr.mxu0 0.0
  %663 = vmatpush1.msra.mxu0 0.0
  %664 = vmatprep.subr.mxu0 0.0
  %665 = vmatpush1.msra.mxu0 0.0
  %666 = vmatprep.subr.mxu0 0.0
  %667 = vmatpush1.msra.mxu0 0.0
  %668 = vmatprep.subr.mxu0 0.0
  %669 = vmatpush1.msra.mxu0 0.0
  %670 = vmatprep.subr.mxu0 0.0
  %671 = vmatpush1.msra.mxu0 0.0
  %672 = vmatprep.subr.mxu0 0.0
  %673 = vmatpush1.msra.mxu0 0.0
  %674 = vmatprep.subr.mxu0 0.0
  %675 = vmatpush1.msra.mxu0 0.0
  %676 = vmatprep.subr.mxu0 0.0
  %677 = vmatpush1.msra.mxu0 0.0
  %678 = vmatprep.subr.mxu0 0.0
  %679 = vmatpush1.msra.mxu0 0.0
  %680 = vmatprep.subr.mxu0 0.0
  %681 = vmatpush1.msra.mxu0 0.0
  %682 = vmatprep.subr.mxu0 0.0
  %683 = vmatpush1.msra.mxu0 0.0
  %684 = vmatprep.subr.mxu0 0.0
  %685 = vmatpush1.msra.mxu0 0.0
  %686 = vmatprep.subr.mxu0 0.0
  %687 = vmatpush1.msra.mxu0 0.0
  %688 = vmatprep.subr.mxu0 0.0
  %689 = vmatpush1.msra.mxu0 0.0
  %690 = vmatprep.subr.mxu0 0.0
  %691 = vmatpush1.msra.mxu0 0.0
  %692 = vmatprep.subr.mxu0 0.0
  %693 = vmatpush1.msra.mxu0 0.0
  %694 = vmatprep.subr.mxu0 0.0
  %695 = vmatpush1.msra.mxu0 0.0
  %696 = vmatprep.subr.mxu0 0.0
  %697 = vmatpush1.msra.mxu0 0.0
  %698 = vmatprep.subr.mxu0 0.0
  %699 = vmatpush1.msra.mxu0 0.0
  %700 = vmatprep.subr.mxu0 0.0
  %701 = vmatpush1.msra.mxu0 0.0
  %702 = vmatprep.subr.mxu0 0.0
  %703 = vmatpush1.msra.mxu0 0.0
  %704 = vmatprep.subr.mxu0 0.0
  %705 = vmatpush1.msra.mxu0 0.0
  %706 = vmatprep.subr.mxu0 0.0
  %707 = vmatpush1.msra.mxu0 0.0
  %708 = vmatprep.subr.mxu0 0.0
  %709 = vmatpush1.msra.mxu0 0.0
  %710 = vmatprep.subr.mxu0 0.0
  %711 = vmatpush1.msra.mxu0 0.0
  %712 = vmatprep.subr.mxu0 0.0
  %713 = vmatpush1.msra.mxu0 0.0
  %714 = vmatprep.subr.mxu0 0.0
  %715 = vmatpush1.msra.mxu0 0.0
  %716 = vmatprep.subr.mxu0 0.0
  %717 = vmatpush1.msra.mxu0 0.0
  %718 = vmatprep.mubr.f32.mxu0 0.0
  %719 = vmatmul.mubr.f32.gmra.mrb[0].mxu0 %v652
  %v720 = vpop.f32.mrb[0].mxu0
  %v721 = vadd.f32 0.0, %v720
  %v722 = vpop.f32.mrb[0].mxu0
  %723 = vdwg.mxu0
  %v724 = vadd.f32 %v648, %v721
  %v725 = vmul.f32 %v724, 0.5
  %v726 = vtanh.pop %v725
  %v727 = vmul.f32 %v726, 0.5
  %v728 = vadd.f32 %v727, 0.5
  %v729 = vadd.f32 %v721, %v424
  %731 = vrot.lane.b32.xlu0 %v729, 96
  %v732 = vpop.permute.xlu0 %731
  %v734 = vmul.f32 %v728, %v732
  %736 = vrot.lane.b32.xlu0 %v734, 32
  %v737 = vpop.permute.xlu0 %736
  %v739 = vadd.f32 %v648, %v737
  %v740 = vtanh.pop %v739
  %v741 = vsub.f32 1.0, %v728
  %743 = vrot.lane.b32.xlu0 %v740, 112
  %v744 = vpop.permute.xlu0 %743
  %v746 = vmul.f32 %v741, %v744
  %v747 = vmul.f32 %v728, %v647
  %v748 = vadd.f32 %v746, %v747
  %v749 = vld [vmem:[#allocation2 + $0x4] sm:$0x1]
  %751 = vrot.lane.b32.xlu0 %v748, 112
  %v752 = vpop.permute.xlu0 %751
  %v753 = vsel %vm343, %v752, 0
  %755 = vmatprep.subr.mxu0 0.0
  %756 = vmatpush1.msra.mxu0 %v16
  %757 = vmatprep.subr.mxu0 0.0
  %758 = vmatpush1.msra.mxu0 %v17
  %759 = vmatprep.subr.mxu0 0.0
  %760 = vmatpush1.msra.mxu0 0.0
  %761 = vmatprep.subr.mxu0 0.0
  %762 = vmatpush1.msra.mxu0 0.0
  %763 = vmatprep.subr.mxu0 0.0
  %764 = vmatpush1.msra.mxu0 0.0
  %765 = vmatprep.subr.mxu0 0.0
  %766 = vmatpush1.msra.mxu0 0.0
  %767 = vmatprep.subr.mxu0 0.0
  %768 = vmatpush1.msra.mxu0 0.0
  %769 = vmatprep.subr.mxu0 0.0
  %770 = vmatpush1.msra.mxu0 0.0
  %771 = vmatprep.subr.mxu0 0.0
  %772 = vmatpush1.msra.mxu0 0.0
  %773 = vmatprep.subr.mxu0 0.0
  %774 = vmatpush1.msra.mxu0 0.0
  %775 = vmatprep.subr.mxu0 0.0
  %776 = vmatpush1.msra.mxu0 0.0
  %777 = vmatprep.subr.mxu0 0.0
  %778 = vmatpush1.msra.mxu0 0.0
  %779 = vmatprep.subr.mxu0 0.0
  %780 = vmatpush1.msra.mxu0 0.0
  %781 = vmatprep.subr.mxu0 0.0
  %782 = vmatpush1.msra.mxu0 0.0
  %783 = vmatprep.subr.mxu0 0.0
  %784 = vmatpush1.msra.mxu0 0.0
  %785 = vmatprep.subr.mxu0 0.0
  %786 = vmatpush1.msra.mxu0 0.0
  %787 = vmatprep.subr.mxu0 0.0
  %788 = vmatpush1.msra.mxu0 0.0
  %789 = vmatprep.subr.mxu0 0.0
  %790 = vmatpush1.msra.mxu0 0.0
  %791 = vmatprep.subr.mxu0 0.0
  %792 = vmatpush1.msra.mxu0 0.0
  %793 = vmatprep.subr.mxu0 0.0
  %794 = vmatpush1.msra.mxu0 0.0
  %795 = vmatprep.subr.mxu0 0.0
  %796 = vmatpush1.msra.mxu0 0.0
  %797 = vmatprep.subr.mxu0 0.0
  %798 = vmatpush1.msra.mxu0 0.0
  %799 = vmatprep.subr.mxu0 0.0
  %800 = vmatpush1.msra.mxu0 0.0
  %801 = vmatprep.subr.mxu0 0.0
  %802 = vmatpush1.msra.mxu0 0.0
  %803 = vmatprep.subr.mxu0 0.0
  %804 = vmatpush1.msra.mxu0 0.0
  %805 = vmatprep.subr.mxu0 0.0
  %806 = vmatpush1.msra.mxu0 0.0
  %807 = vmatprep.subr.mxu0 0.0
  %808 = vmatpush1.msra.mxu0 0.0
  %809 = vmatprep.subr.mxu0 0.0
  %810 = vmatpush1.msra.mxu0 0.0
  %811 = vmatprep.subr.mxu0 0.0
  %812 = vmatpush1.msra.mxu0 0.0
  %813 = vmatprep.subr.mxu0 0.0
  %814 = vmatpush1.msra.mxu0 0.0
  %815 = vmatprep.subr.mxu0 0.0
  %816 = vmatpush1.msra.mxu0 0.0
  %817 = vmatprep.subr.mxu0 0.0
  %818 = vmatpush1.msra.mxu0 0.0
  %819 = vmatprep.mubr.f32.mxu0 0.0
  %820 = vmatmul.mubr.f32.gmra.mrb[0].mxu0 %v753
  %v821 = vpop.f32.mrb[0].mxu0
  %v822 = vadd.f32 0.0, %v821
  %v823 = vpop.f32.mrb[0].mxu0
  %824 = vdwg.mxu0
  %v825 = vadd.f32 %v749, %v822
  %v826 = vmul.f32 %v825, 0.5
  %v827 = vtanh.pop %v826
  %v828 = vmul.f32 %v827, 0.5
  %v829 = vadd.f32 %v828, 0.5
  %v830 = vadd.f32 %v822, %v424
  %832 = vrot.lane.b32.xlu0 %v830, 96
  %v833 = vpop.permute.xlu0 %832
  %v835 = vmul.f32 %v829, %v833
  %837 = vrot.lane.b32.xlu0 %v835, 32
  %v838 = vpop.permute.xlu0 %837
  %v840 = vadd.f32 %v749, %v838
  %v841 = vtanh.pop %v840
  %v842 = vsub.f32 1.0, %v829
  %844 = vrot.lane.b32.xlu0 %v841, 112
  %v845 = vpop.permute.xlu0 %844
  %v847 = vmul.f32 %v842, %v845
  %v848 = vmul.f32 %v829, %v748
  %v849 = vadd.f32 %v847, %v848
  %v850 = vld [vmem:[#allocation2 + $0x5] sm:$0x1]
  %852 = vrot.lane.b32.xlu0 %v849, 112
  %v853 = vpop.permute.xlu0 %852
  %v854 = vsel %vm343, %v853, 0
  %856 = vmatprep.subr.mxu0 0.0
  %857 = vmatpush1.msra.mxu0 %v16
  %858 = vmatprep.subr.mxu0 0.0
  %859 = vmatpush1.msra.mxu0 %v17
  %860 = vmatprep.subr.mxu0 0.0
  %861 = vmatpush1.msra.mxu0 0.0
  %862 = vmatprep.subr.mxu0 0.0
  %863 = vmatpush1.msra.mxu0 0.0
  %864 = vmatprep.subr.mxu0 0.0
  %865 = vmatpush1.msra.mxu0 0.0
  %866 = vmatprep.subr.mxu0 0.0
  %867 = vmatpush1.msra.mxu0 0.0
  %868 = vmatprep.subr.mxu0 0.0
  %869 = vmatpush1.msra.mxu0 0.0
  %870 = vmatprep.subr.mxu0 0.0
  %871 = vmatpush1.msra.mxu0 0.0
  %872 = vmatprep.subr.mxu0 0.0
  %873 = vmatpush1.msra.mxu0 0.0
  %874 = vmatprep.subr.mxu0 0.0
  %875 = vmatpush1.msra.mxu0 0.0
  %876 = vmatprep.subr.mxu0 0.0
  %877 = vmatpush1.msra.mxu0 0.0
  %878 = vmatprep.subr.mxu0 0.0
  %879 = vmatpush1.msra.mxu0 0.0
  %880 = vmatprep.subr.mxu0 0.0
  %881 = vmatpush1.msra.mxu0 0.0
  %882 = vmatprep.subr.mxu0 0.0
  %883 = vmatpush1.msra.mxu0 0.0
  %884 = vmatprep.subr.mxu0 0.0
  %885 = vmatpush1.msra.mxu0 0.0
  %886 = vmatprep.subr.mxu0 0.0
  %887 = vmatpush1.msra.mxu0 0.0
  %888 = vmatprep.subr.mxu0 0.0
  %889 = vmatpush1.msra.mxu0 0.0
  %890 = vmatprep.subr.mxu0 0.0
  %891 = vmatpush1.msra.mxu0 0.0
  %892 = vmatprep.subr.mxu0 0.0
  %893 = vmatpush1.msra.mxu0 0.0
  %894 = vmatprep.subr.mxu0 0.0
  %895 = vmatpush1.msra.mxu0 0.0
  %896 = vmatprep.subr.mxu0 0.0
  %897 = vmatpush1.msra.mxu0 0.0
  %898 = vmatprep.subr.mxu0 0.0
  %899 = vmatpush1.msra.mxu0 0.0
  %900 = vmatprep.subr.mxu0 0.0
  %901 = vmatpush1.msra.mxu0 0.0
  %902 = vmatprep.subr.mxu0 0.0
  %903 = vmatpush1.msra.mxu0 0.0
  %904 = vmatprep.subr.mxu0 0.0
  %905 = vmatpush1.msra.mxu0 0.0
  %906 = vmatprep.subr.mxu0 0.0
  %907 = vmatpush1.msra.mxu0 0.0
  %908 = vmatprep.subr.mxu0 0.0
  %909 = vmatpush1.msra.mxu0 0.0
  %910 = vmatprep.subr.mxu0 0.0
  %911 = vmatpush1.msra.mxu0 0.0
  %912 = vmatprep.subr.mxu0 0.0
  %913 = vmatpush1.msra.mxu0 0.0
  %914 = vmatprep.subr.mxu0 0.0
  %915 = vmatpush1.msra.mxu0 0.0
  %916 = vmatprep.subr.mxu0 0.0
  %917 = vmatpush1.msra.mxu0 0.0
  %918 = vmatprep.subr.mxu0 0.0
  %919 = vmatpush1.msra.mxu0 0.0
  %920 = vmatprep.mubr.f32.mxu0 0.0
  %921 = vmatmul.mubr.f32.gmra.mrb[0].mxu0 %v854
  %v922 = vpop.f32.mrb[0].mxu0
  %v923 = vadd.f32 0.0, %v922
  %v924 = vpop.f32.mrb[0].mxu0
  %925 = vdwg.mxu0
  %v926 = vadd.f32 %v850, %v923
  %v927 = vmul.f32 %v926, 0.5
  %v928 = vtanh.pop %v927
  %v929 = vmul.f32 %v928, 0.5
  %v930 = vadd.f32 %v929, 0.5
  %v931 = vadd.f32 %v923, %v424
  %933 = vrot.lane.b32.xlu0 %v931, 96
  %v934 = vpop.permute.xlu0 %933
  %v936 = vmul.f32 %v930, %v934
  %938 = vrot.lane.b32.xlu0 %v936, 32
  %v939 = vpop.permute.xlu0 %938
  %v941 = vadd.f32 %v850, %v939
  %v942 = vtanh.pop %v941
  %v943 = vsub.f32 1.0, %v930
  %945 = vrot.lane.b32.xlu0 %v942, 112
  %v946 = vpop.permute.xlu0 %945
  %v948 = vmul.f32 %v943, %v946
  %v949 = vmul.f32 %v930, %v849
  %v950 = vadd.f32 %v948, %v949
  %v951 = vld [vmem:[#allocation2 + $0x6] sm:$0x1]
  %953 = vrot.lane.b32.xlu0 %v950, 112
  %v954 = vpop.permute.xlu0 %953
  %v955 = vsel %vm343, %v954, 0
  %957 = vmatprep.subr.mxu0 0.0
  %958 = vmatpush1.msra.mxu0 %v16
  %959 = vmatprep.subr.mxu0 0.0
  %960 = vmatpush1.msra.mxu0 %v17
  %961 = vmatprep.subr.mxu0 0.0
  %962 = vmatpush1.msra.mxu0 0.0
  %963 = vmatprep.subr.mxu0 0.0
  %964 = vmatpush1.msra.mxu0 0.0
  %965 = vmatprep.subr.mxu0 0.0
  %966 = vmatpush1.msra.mxu0 0.0
  %967 = vmatprep.subr.mxu0 0.0
  %968 = vmatpush1.msra.mxu0 0.0
  %969 = vmatprep.subr.mxu0 0.0
  %970 = vmatpush1.msra.mxu0 0.0
  %971 = vmatprep.subr.mxu0 0.0
  %972 = vmatpush1.msra.mxu0 0.0
  %973 = vmatprep.subr.mxu0 0.0
  %974 = vmatpush1.msra.mxu0 0.0
  %975 = vmatprep.subr.mxu0 0.0
  %976 = vmatpush1.msra.mxu0 0.0
  %977 = vmatprep.subr.mxu0 0.0
  %978 = vmatpush1.msra.mxu0 0.0
  %979 = vmatprep.subr.mxu0 0.0
  %980 = vmatpush1.msra.mxu0 0.0
  %981 = vmatprep.subr.mxu0 0.0
  %982 = vmatpush1.msra.mxu0 0.0
  %983 = vmatprep.subr.mxu0 0.0
  %984 = vmatpush1.msra.mxu0 0.0
  %985 = vmatprep.subr.mxu0 0.0
  %986 = vmatpush1.msra.mxu0 0.0
  %987 = vmatprep.subr.mxu0 0.0
  %988 = vmatpush1.msra.mxu0 0.0
  %989 = vmatprep.subr.mxu0 0.0
  %990 = vmatpush1.msra.mxu0 0.0
  %991 = vmatprep.subr.mxu0 0.0
  %992 = vmatpush1.msra.mxu0 0.0
  %993 = vmatprep.subr.mxu0 0.0
  %994 = vmatpush1.msra.mxu0 0.0
  %995 = vmatprep.subr.mxu0 0.0
  %996 = vmatpush1.msra.mxu0 0.0
  %997 = vmatprep.subr.mxu0 0.0
  %998 = vmatpush1.msra.mxu0 0.0
  %999 = vmatprep.subr.mxu0 0.0
  %1000 = vmatpush1.msra.mxu0 0.0
  %1001 = vmatprep.subr.mxu0 0.0
  %1002 = vmatpush1.msra.mxu0 0.0
  %1003 = vmatprep.subr.mxu0 0.0
  %1004 = vmatpush1.msra.mxu0 0.0
  %1005 = vmatprep.subr.mxu0 0.0
  %1006 = vmatpush1.msra.mxu0 0.0
  %1007 = vmatprep.subr.mxu0 0.0
  %1008 = vmatpush1.msra.mxu0 0.0
  %1009 = vmatprep.subr.mxu0 0.0
  %1010 = vmatpush1.msra.mxu0 0.0
  %1011 = vmatprep.subr.mxu0 0.0
  %1012 = vmatpush1.msra.mxu0 0.0
  %1013 = vmatprep.subr.mxu0 0.0
  %1014 = vmatpush1.msra.mxu0 0.0
  %1015 = vmatprep.subr.mxu0 0.0
  %1016 = vmatpush1.msra.mxu0 0.0
  %1017 = vmatprep.subr.mxu0 0.0
  %1018 = vmatpush1.msra.mxu0 0.0
  %1019 = vmatprep.subr.mxu0 0.0
  %1020 = vmatpush1.msra.mxu0 0.0
  %1021 = vmatprep.mubr.f32.mxu0 0.0
  %1022 = vmatmul.mubr.f32.gmra.mrb[0].mxu0 %v955
  %v1023 = vpop.f32.mrb[0].mxu0
  %v1024 = vadd.f32 0.0, %v1023
  %v1025 = vpop.f32.mrb[0].mxu0
  %1026 = vdwg.mxu0
  %v1027 = vadd.f32 %v951, %v1024
  %v1028 = vmul.f32 %v1027, 0.5
  %v1029 = vtanh.pop %v1028
  %v1030 = vmul.f32 %v1029, 0.5
  %v1031 = vadd.f32 %v1030, 0.5
  %v1032 = vadd.f32 %v1024, %v424
  %1034 = vrot.lane.b32.xlu0 %v1032, 96
  %v1035 = vpop.permute.xlu0 %1034
  %v1037 = vmul.f32 %v1031, %v1035
  %1039 = vrot.lane.b32.xlu0 %v1037, 32
  %v1040 = vpop.permute.xlu0 %1039
  %v1042 = vadd.f32 %v951, %v1040
  %v1043 = vtanh.pop %v1042
  %v1044 = vsub.f32 1.0, %v1031
  %1046 = vrot.lane.b32.xlu0 %v1043, 112
  %v1047 = vpop.permute.xlu0 %1046
  %v1049 = vmul.f32 %v1044, %v1047
  %v1050 = vmul.f32 %v1031, %v950
  %v1051 = vadd.f32 %v1049, %v1050
  %v1052 = vld [vmem:[#allocation2 + $0x7] sm:$0x1]
  %1054 = vrot.lane.b32.xlu0 %v1051, 112
  %v1055 = vpop.permute.xlu0 %1054
  %v1056 = vsel %vm343, %v1055, 0
  %1058 = vmatprep.subr.mxu0 0.0
  %1059 = vmatpush1.msra.mxu0 %v16
  %1060 = vmatprep.subr.mxu0 0.0
  %1061 = vmatpush1.msra.mxu0 %v17
  %1062 = vmatprep.subr.mxu0 0.0
  %1063 = vmatpush1.msra.mxu0 0.0
  %1064 = vmatprep.subr.mxu0 0.0
  %1065 = vmatpush1.msra.mxu0 0.0
  %1066 = vmatprep.subr.mxu0 0.0
  %1067 = vmatpush1.msra.mxu0 0.0
  %1068 = vmatprep.subr.mxu0 0.0
  %1069 = vmatpush1.msra.mxu0 0.0
  %1070 = vmatprep.subr.mxu0 0.0
  %1071 = vmatpush1.msra.mxu0 0.0
  %1072 = vmatprep.subr.mxu0 0.0
  %1073 = vmatpush1.msra.mxu0 0.0
  %1074 = vmatprep.subr.mxu0 0.0
  %1075 = vmatpush1.msra.mxu0 0.0
  %1076 = vmatprep.subr.mxu0 0.0
  %1077 = vmatpush1.msra.mxu0 0.0
  %1078 = vmatprep.subr.mxu0 0.0
  %1079 = vmatpush1.msra.mxu0 0.0
  %1080 = vmatprep.subr.mxu0 0.0
  %1081 = vmatpush1.msra.mxu0 0.0
  %1082 = vmatprep.subr.mxu0 0.0
  %1083 = vmatpush1.msra.mxu0 0.0
  %1084 = vmatprep.subr.mxu0 0.0
  %1085 = vmatpush1.msra.mxu0 0.0
  %1086 = vmatprep.subr.mxu0 0.0
  %1087 = vmatpush1.msra.mxu0 0.0
  %1088 = vmatprep.subr.mxu0 0.0
  %1089 = vmatpush1.msra.mxu0 0.0
  %1090 = vmatprep.subr.mxu0 0.0
  %1091 = vmatpush1.msra.mxu0 0.0
  %1092 = vmatprep.subr.mxu0 0.0
  %1093 = vmatpush1.msra.mxu0 0.0
  %1094 = vmatprep.subr.mxu0 0.0
  %1095 = vmatpush1.msra.mxu0 0.0
  %1096 = vmatprep.subr.mxu0 0.0
  %1097 = vmatpush1.msra.mxu0 0.0
  %1098 = vmatprep.subr.mxu0 0.0
  %1099 = vmatpush1.msra.mxu0 0.0
  %1100 = vmatprep.subr.mxu0 0.0
  %1101 = vmatpush1.msra.mxu0 0.0
  %1102 = vmatprep.subr.mxu0 0.0
  %1103 = vmatpush1.msra.mxu0 0.0
  %1104 = vmatprep.subr.mxu0 0.0
  %1105 = vmatpush1.msra.mxu0 0.0
  %1106 = vmatprep.subr.mxu0 0.0
  %1107 = vmatpush1.msra.mxu0 0.0
  %1108 = vmatprep.subr.mxu0 0.0
  %1109 = vmatpush1.msra.mxu0 0.0
  %1110 = vmatprep.subr.mxu0 0.0
  %1111 = vmatpush1.msra.mxu0 0.0
  %1112 = vmatprep.subr.mxu0 0.0
  %1113 = vmatpush1.msra.mxu0 0.0
  %1114 = vmatprep.subr.mxu0 0.0
  %1115 = vmatpush1.msra.mxu0 0.0
  %1116 = vmatprep.subr.mxu0 0.0
  %1117 = vmatpush1.msra.mxu0 0.0
  %1118 = vmatprep.subr.mxu0 0.0
  %1119 = vmatpush1.msra.mxu0 0.0
  %1120 = vmatprep.subr.mxu0 0.0
  %1121 = vmatpush1.msra.mxu0 0.0
  %1122 = vmatprep.mubr.f32.mxu0 0.0
  %1123 = vmatmul.mubr.f32.gmra.mrb[0].mxu0 %v1056
  %v1124 = vpop.f32.mrb[0].mxu0
  %v1125 = vadd.f32 0.0, %v1124
  %v1126 = vpop.f32.mrb[0].mxu0
  %1127 = vdwg.mxu0
  %v1128 = vadd.f32 %v1052, %v1125
  %v1129 = vmul.f32 %v1128, 0.5
  %v1130 = vtanh.pop %v1129
  %v1131 = vmul.f32 %v1130, 0.5
  %v1132 = vadd.f32 %v1131, 0.5
  %v1133 = vadd.f32 %v1125, %v424
  %1135 = vrot.lane.b32.xlu0 %v1133, 96
  %v1136 = vpop.permute.xlu0 %1135
  %v1138 = vmul.f32 %v1132, %v1136
  %1140 = vrot.lane.b32.xlu0 %v1138, 32
  %v1141 = vpop.permute.xlu0 %1140
  %v1143 = vadd.f32 %v1052, %v1141
  %v1144 = vtanh.pop %v1143
  %v1145 = vsub.f32 1.0, %v1132
  %1147 = vrot.lane.b32.xlu0 %v1144, 112
  %v1148 = vpop.permute.xlu0 %1147
  %v1150 = vmul.f32 %v1145, %v1148
  %v1151 = vmul.f32 %v1132, %v1051
  %v1152 = vadd.f32 %v1150, %v1151
  %v1154 = vrot.slane %v1152, 7
  %vm1156 = vcmask 1040384
  %v1157 = vsel %vm1156, %v1051, %v1154
  %1159 = vrot.lane.b32.xlu0 %v260, 16
  %v1160 = vpop.permute.xlu0 %1159
  %v1162 = vmul.f32 %v1157, %v1160
  %1164 = vrot.lane.b32.xlu0 %v1162, 112
  %v1165 = vpop.permute.xlu0 %1164
  %vm1167 = vcmask 123904
  %v1168 = vsel %vm1167, %v1165, 0.0
  %1169 = vadd.xlane.f32.xlu0 %v1168
  %v1170 = vpop.xlane.xlu0 %1169
  %v1171 = vmul.f32 %v1170, 0.5
  %v1172 = vtanh.pop %v1171
  %v1173 = vmul.f32 %v1172, 0.5
  %v1174 = vadd.f32 %v1173, 0.5
  %vm1175 = vcmask 1024
  %1176 = vst.msk [vmem:[%s2] sm:$0x3] %vm1175, %v1174
  // Predicated region
  $region10: #{cpc_net_forward.1} parent=0 // pred_check
    _
  $region11: #{cpc_net_forward.1} parent=0 // pred_check_branch
    %1178 = sbr.rel (0) target = $region13
  $region12: #{cpc_net_forward.1} parent=0 // pred_region
    _
  $region13: #{cpc_net_forward.1} parent=0 // pred_fallthru
    _
  // Predicated region
  $region14: #{cpc_net_forward.1} parent=0 // pred_check
    _
  $region15: #{cpc_net_forward.1} parent=0 // pred_check_branch
    %1180 = sbr.rel (0) target = $region17
  $region16: #{cpc_net_forward.1} parent=0 // pred_region
    _
  $region17: #{cpc_net_forward.1} parent=0 // pred_fallthru
    _

</llo_original>
